<compile_context>
chip_gen: v5e
topology: v5e:2x2
jax: 0.10.0
libtpu: 0.0.40
codegen_flags: <defaults>
</compile_context>

<pallas_src>
import jax
import jax.numpy as jnp
from jax.experimental import pallas as pl
from jax.experimental.pallas import tpu as pltpu


# ------------------------------ fused kernel --------------------------------

def make_fused_lstm_kernel(T, Bp, H, d_ins):
    """Fused kernel: len(d_ins) stacked LSTM layers + FC(H->1) head.

    Ref layout:
      x_ref      (T*Bp, D_in)   time-major rows: row t*Bp + b = x[b, t]
      w_ref      (L, DW, 4H)    per layer: rows [0:d_l]      = W_ih^T (d_l,4H)
                                           rows [d_l:d_l+H]  = W_hh^T (H, 4H)
      small_ref  (L+1, 4H)      rows 0..L-1: combined bias (b_ih + b_hh)
                                row  L     : lanes [0:H] = fc_w, lane [H] = fc_b
      out_ref    (Bp, 1)        model output (padded batch)
    Gate order follows PyTorch: i, f, g, o.
    """
    L = len(d_ins)

    def kernel(x_ref, w_ref, small_ref, out_ref):
        seq = x_ref[...].astype(jnp.float32)              # (T*Bp, D_l)
        h_last = None

        for l in range(L):
            d_l = d_ins[l]
            w_slab = w_ref[l]                             # (DW, 4H)
            wih = w_slab[:d_l, :]                         # (d_l, 4H)
            whh = w_slab[d_l:d_l + H, :]                  # (H, 4H)
            b = small_ref[l:l + 1, :]                     # (1, 4H)

            # Hoisted input projection for ALL timesteps (+ bias folded in):
            # one big MXU matmul outside the serial recurrence.
            proj = jnp.dot(seq, wih,
                           preferred_element_type=jnp.float32) + b   # (T*Bp, 4H)

            h = jnp.zeros((Bp, H), dtype=jnp.float32)
            c = jnp.zeros((Bp, H), dtype=jnp.float32)
            last_layer = (l == L - 1)
            hs = []

            # Fully unrolled recurrence: static slices only; only the
            # (Bp,H)@(H,4H) recurrent matmul is serialized.
            for t in range(T):
                gates = proj[t * Bp:(t + 1) * Bp, :] + jnp.dot(
                    h, whh, preferred_element_type=jnp.float32)      # (Bp, 4H)
                # Two wide EUP pushes over the full (8,128) tile, then cheap
                # lane-slices for the individual gates.
                sig = jax.nn.sigmoid(gates)
                th = jnp.tanh(gates)
                i_g = sig[:, 0 * H:1 * H]
                f_g = sig[:, 1 * H:2 * H]
                g_g = th[:, 2 * H:3 * H]
                o_g = sig[:, 3 * H:4 * H]
                c = f_g * c + i_g * g_g
                h = o_g * jnp.tanh(c)
                if not last_layer:
                    hs.append(h)                          # stays in vregs

            if not last_layer:
                # Inter-layer hand-off without any VMEM scratch round-trip.
                seq = jnp.concatenate(hs, axis=0)         # (T*Bp, H)
            h_last = h

        # Dropout is identity at inference.  Fused FC head on the last hidden
        # state: VPU multiply + lane reduction (no extra MXU pass / HBM trip).
        fcw = small_ref[L:L + 1, 0:H]                     # (1, H)
        fcb = small_ref[L:L + 1, H:H + 1]                 # (1, 1)
        out = jnp.sum(h_last * fcw, axis=1, keepdims=True) + fcb      # (Bp, 1)
        out_ref[...] = out.astype(out_ref.dtype)

    return kernel


# ------------------------------- wrapper -------------------------------------

def lstm_model_forward(x_btd, params):
    """Equivalent of LSTM.forward (eval mode).  x_btd: (B, T, input_size)."""
    B, T, Din = x_btd.shape
    H = params["lstm"][0]["w_hh"].shape[1]
    L = len(params["lstm"])

    # Pad batch to a full f32 sublane tile (multiple of 8) -> aligned slices.
    Bp = max(8, ((B + 7) // 8) * 8)
    x_p = jnp.pad(x_btd.astype(jnp.float32), ((0, Bp - B), (0, 0), (0, 0)))

    # Time-major + flattened rows so layer-0's input projection is one matmul.
    x2d = jnp.transpose(x_p, (1, 0, 2)).reshape(T * Bp, Din)

    # Stack per-layer [W_ih^T; W_hh^T] into one padded slab per layer.
    d_ins = [Din if l == 0 else H for l in range(L)]
    DW = max(d + H for d in d_ins)
    slabs = []
    for l, layer in enumerate(params["lstm"]):
        slab = jnp.zeros((DW, 4 * H), jnp.float32)
        slab = slab.at[:d_ins[l]].set(jnp.transpose(layer["w_ih"]).astype(jnp.float32))
        slab = slab.at[d_ins[l]:d_ins[l] + H].set(
            jnp.transpose(layer["w_hh"]).astype(jnp.float32))
        slabs.append(slab)
    w_all = jnp.stack(slabs, axis=0)                       # (L, DW, 4H)

    # Pack all small params (biases, fc_w, fc_b) into one array.
    small = jnp.zeros((L + 1, 4 * H), jnp.float32)
    for l, layer in enumerate(params["lstm"]):
        small = small.at[l].set((layer["b_ih"] + layer["b_hh"]).astype(jnp.float32))
    small = small.at[L, :H].set(params["fc_w"].reshape(H).astype(jnp.float32))
    small = small.at[L, H].set(params["fc_b"].reshape(())[()].astype(jnp.float32))

    kernel = make_fused_lstm_kernel(T, Bp, H, d_ins)
    out_p = pl.pallas_call(
        kernel,
        out_shape=jax.ShapeDtypeStruct((Bp, 1), jnp.float32),
        grid=(1,),
        in_specs=[
            pl.BlockSpec((T * Bp, Din), lambda i: (0, 0)),
            pl.BlockSpec((L, DW, 4 * H), lambda i: (0, 0, 0)),
            pl.BlockSpec((L + 1, 4 * H), lambda i: (0, 0)),
        ],
        out_specs=pl.BlockSpec((Bp, 1), lambda i: (0, 0)),
        compiler_params=pltpu.CompilerParams(
            dimension_semantics=("arbitrary",)),
    )(x2d, w_all, small)
    return out_p[:B]


# ------------------------- deterministic parameters --------------------------

def init_params(key, input_size, hidden_size, num_layers):
    """Matches PyTorch default init: U(-1/sqrt(H), 1/sqrt(H)) for all params."""
    k = 1.0 / float(hidden_size) ** 0.5
    params = {"lstm": []}
    for l in range(num_layers):
        d_in = input_size if l == 0 else hidden_size
        key, k1, k2, k3, k4 = jax.random.split(key, 5)
        params["lstm"].append({
            "w_ih": jax.random.uniform(k1, (4 * hidden_size, d_in), jnp.float32, -k, k),
            "w_hh": jax.random.uniform(k2, (4 * hidden_size, hidden_size), jnp.float32, -k, k),
            "b_ih": jax.random.uniform(k3, (4 * hidden_size,), jnp.float32, -k, k),
            "b_hh": jax.random.uniform(k4, (4 * hidden_size,), jnp.float32, -k, k),
        })
    key, kw, kb = jax.random.split(key, 3)
    params["fc_w"] = jax.random.uniform(kw, (1, hidden_size), jnp.float32, -k, k)
    params["fc_b"] = jax.random.uniform(kb, (1,), jnp.float32, -k, k)
    return params


# ------------------------------ pure-JAX reference ---------------------------

def ref_forward(x_btd, params):
    x = jnp.transpose(x_btd, (1, 0, 2)).astype(jnp.float32)
    H = params["lstm"][0]["w_hh"].shape[1]
    for layer in params["lstm"]:
        T, B, _ = x.shape
        h = jnp.zeros((B, H), jnp.float32)
        c = jnp.zeros((B, H), jnp.float32)
        outs = []
        for t in range(T):
            gates = (x[t] @ layer["w_ih"].T + h @ layer["w_hh"].T
                     + layer["b_ih"] + layer["b_hh"])
            i, f, g, o = jnp.split(gates, 4, axis=1)
            c = jax.nn.sigmoid(f) * c + jax.nn.sigmoid(i) * jnp.tanh(g)
            h = jax.nn.sigmoid(o) * jnp.tanh(c)
            outs.append(h)
        x = jnp.stack(outs, axis=0)
    return x[-1] @ params["fc_w"].T + params["fc_b"]


# ----------------------------------- main ------------------------------------

if __name__ == "__main__":
    # Small shapes consistent with the module's forward:
    batch, seq_len = 2, 8
    input_size, hidden_size, num_layers, dropout_rate = 4, 32, 2, 0.1  # dropout: identity at inference

    key = jax.random.PRNGKey(0)
    key, kx = jax.random.split(key)
    x = jax.random.normal(kx, (batch, seq_len, input_size), dtype=jnp.float32)

    params = init_params(key, input_size, hidden_size, num_layers)

    out = lstm_model_forward(x, params)
    out = jax.block_until_ready(out)

    ref = ref_forward(x, params)
    assert out.shape == (batch, 1), out.shape
    assert jnp.allclose(out, ref, atol=1e-5, rtol=1e-5), (out, ref)

    print("KERNEL_OK")
</pallas_src>

<mosaic_0001>
module attributes {stable_mosaic.version = 11 : i64} {
  func.func @kernel(%arg0: i32, %arg1: memref<64x4xf32, #tpu.memory_space<vmem>>, %arg2: memref<2x64x128xf32, #tpu.memory_space<vmem>>, %arg3: memref<3x128xf32, #tpu.memory_space<vmem>>, %arg4: memref<8x1xf32, #tpu.memory_space<vmem>>) attributes {dimension_semantics = [#tpu.dimension_semantics<arbitrary>], iteration_bounds = array<i64: 1>, scalar_prefetch = 0 : i64, scratch_operands = 0 : i64, tpu.core_type = #tpu.core_type<tc>, window_params = [{pipeline_mode = #tpu.pipeline_mode<synchronous>, transform_indices = @transform_0, window_bounds = array<i64: 64, 4>}, {pipeline_mode = #tpu.pipeline_mode<synchronous>, transform_indices = @transform_1, window_bounds = array<i64: 2, 64, 128>}, {pipeline_mode = #tpu.pipeline_mode<synchronous>, transform_indices = @transform_2, window_bounds = array<i64: 3, 128>}, {pipeline_mode = #tpu.pipeline_mode<synchronous>, transform_indices = @transform_3, window_bounds = array<i64: 8, 1>}]} {
    %c0 = arith.constant 0 : index
    %c0_0 = arith.constant 0 : index
    %0 = vector.load %arg1[%c0, %c0_0] : memref<64x4xf32, #tpu.memory_space<vmem>>, vector<64x4xf32>
    %c0_1 = arith.constant 0 : index
    %c0_2 = arith.constant 0 : index
    %c0_3 = arith.constant 0 : index
    %1 = vector.load %arg2[%c0_1, %c0_2, %c0_3] : memref<2x64x128xf32, #tpu.memory_space<vmem>>, vector<1x64x128xf32>
    %2 = vector.shape_cast %1 : vector<1x64x128xf32> to vector<64x128xf32>
    %3 = vector.extract_strided_slice %2 {offsets = [0, 0], sizes = [4, 128], strides = [1, 1]} : vector<64x128xf32> to vector<4x128xf32>
    %4 = vector.extract_strided_slice %2 {offsets = [4, 0], sizes = [32, 128], strides = [1, 1]} : vector<64x128xf32> to vector<32x128xf32>
    %c0_4 = arith.constant 0 : index
    %c0_5 = arith.constant 0 : index
    %5 = vector.load %arg3[%c0_4, %c0_5] : memref<3x128xf32, #tpu.memory_space<vmem>>, vector<1x128xf32>
    %cst = arith.constant dense<0.000000e+00> : vector<64x128xf32>
    %6 = tpu.matmul %0, %3, %cst {dimension_numbers = #tpu.dot_dimension_numbers<[1], [0], [0], [1], [0, 0, 1, 1], [], []>} : vector<64x4xf32>, vector<4x128xf32>, vector<64x128xf32> -> vector<64x128xf32>
    %7 = vector.broadcast %5 : vector<1x128xf32> to vector<64x128xf32>
    %8 = arith.addf %6, %7 : vector<64x128xf32>
    %cst_6 = arith.constant 0.000000e+00 : f32
    %9 = vector.broadcast %cst_6 : f32 to vector<8x32xf32>
    %cst_7 = arith.constant 0.000000e+00 : f32
    %10 = vector.broadcast %cst_7 : f32 to vector<8x32xf32>
    %11 = vector.extract_strided_slice %8 {offsets = [0, 0], sizes = [8, 128], strides = [1, 1]} : vector<64x128xf32> to vector<8x128xf32>
    %cst_8 = arith.constant dense<0.000000e+00> : vector<8x128xf32>
    %12 = tpu.matmul %9, %4, %cst_8 {dimension_numbers = #tpu.dot_dimension_numbers<[1], [0], [0], [1], [0, 0, 1, 1], [], []>} : vector<8x32xf32>, vector<32x128xf32>, vector<8x128xf32> -> vector<8x128xf32>
    %13 = arith.addf %11, %12 : vector<8x128xf32>
    %14 = arith.negf %13 : vector<8x128xf32>
    %15 = math.exp %14 : vector<8x128xf32>
    %cst_9 = arith.constant 1.000000e+00 : f32
    %16 = vector.broadcast %cst_9 : f32 to vector<8x128xf32>
    %17 = arith.addf %16, %15 : vector<8x128xf32>
    %18 = arith.divf %16, %17 : vector<8x128xf32>
    %19 = math.tanh %13 : vector<8x128xf32>
    %20 = vector.extract_strided_slice %18 {offsets = [0, 0], sizes = [8, 32], strides = [1, 1]} : vector<8x128xf32> to vector<8x32xf32>
    %21 = vector.extract_strided_slice %18 {offsets = [0, 32], sizes = [8, 32], strides = [1, 1]} : vector<8x128xf32> to vector<8x32xf32>
    %22 = vector.extract_strided_slice %19 {offsets = [0, 64], sizes = [8, 32], strides = [1, 1]} : vector<8x128xf32> to vector<8x32xf32>
    %23 = vector.extract_strided_slice %18 {offsets = [0, 96], sizes = [8, 32], strides = [1, 1]} : vector<8x128xf32> to vector<8x32xf32>
    %24 = arith.mulf %21, %10 : vector<8x32xf32>
    %25 = arith.mulf %20, %22 : vector<8x32xf32>
    %26 = arith.addf %24, %25 : vector<8x32xf32>
    %27 = math.tanh %26 : vector<8x32xf32>
    %28 = arith.mulf %23, %27 : vector<8x32xf32>
    %29 = vector.extract_strided_slice %8 {offsets = [8, 0], sizes = [8, 128], strides = [1, 1]} : vector<64x128xf32> to vector<8x128xf32>
    %cst_10 = arith.constant dense<0.000000e+00> : vector<8x128xf32>
    %30 = tpu.matmul %28, %4, %cst_10 {dimension_numbers = #tpu.dot_dimension_numbers<[1], [0], [0], [1], [0, 0, 1, 1], [], []>} : vector<8x32xf32>, vector<32x128xf32>, vector<8x128xf32> -> vector<8x128xf32>
    %31 = arith.addf %29, %30 : vector<8x128xf32>
    %32 = arith.negf %31 : vector<8x128xf32>
    %33 = math.exp %32 : vector<8x128xf32>
    %cst_11 = arith.constant 1.000000e+00 : f32
    %34 = vector.broadcast %cst_11 : f32 to vector<8x128xf32>
    %35 = arith.addf %34, %33 : vector<8x128xf32>
    %36 = arith.divf %34, %35 : vector<8x128xf32>
    %37 = math.tanh %31 : vector<8x128xf32>
    %38 = vector.extract_strided_slice %36 {offsets = [0, 0], sizes = [8, 32], strides = [1, 1]} : vector<8x128xf32> to vector<8x32xf32>
    %39 = vector.extract_strided_slice %36 {offsets = [0, 32], sizes = [8, 32], strides = [1, 1]} : vector<8x128xf32> to vector<8x32xf32>
    %40 = vector.extract_strided_slice %37 {offsets = [0, 64], sizes = [8, 32], strides = [1, 1]} : vector<8x128xf32> to vector<8x32xf32>
    %41 = vector.extract_strided_slice %36 {offsets = [0, 96], sizes = [8, 32], strides = [1, 1]} : vector<8x128xf32> to vector<8x32xf32>
    %42 = arith.mulf %39, %26 : vector<8x32xf32>
    %43 = arith.mulf %38, %40 : vector<8x32xf32>
    %44 = arith.addf %42, %43 : vector<8x32xf32>
    %45 = math.tanh %44 : vector<8x32xf32>
    %46 = arith.mulf %41, %45 : vector<8x32xf32>
    %47 = vector.extract_strided_slice %8 {offsets = [16, 0], sizes = [8, 128], strides = [1, 1]} : vector<64x128xf32> to vector<8x128xf32>
    %cst_12 = arith.constant dense<0.000000e+00> : vector<8x128xf32>
    %48 = tpu.matmul %46, %4, %cst_12 {dimension_numbers = #tpu.dot_dimension_numbers<[1], [0], [0], [1], [0, 0, 1, 1], [], []>} : vector<8x32xf32>, vector<32x128xf32>, vector<8x128xf32> -> vector<8x128xf32>
    %49 = arith.addf %47, %48 : vector<8x128xf32>
    %50 = arith.negf %49 : vector<8x128xf32>
    %51 = math.exp %50 : vector<8x128xf32>
    %cst_13 = arith.constant 1.000000e+00 : f32
    %52 = vector.broadcast %cst_13 : f32 to vector<8x128xf32>
    %53 = arith.addf %52, %51 : vector<8x128xf32>
    %54 = arith.divf %52, %53 : vector<8x128xf32>
    %55 = math.tanh %49 : vector<8x128xf32>
    %56 = vector.extract_strided_slice %54 {offsets = [0, 0], sizes = [8, 32], strides = [1, 1]} : vector<8x128xf32> to vector<8x32xf32>
    %57 = vector.extract_strided_slice %54 {offsets = [0, 32], sizes = [8, 32], strides = [1, 1]} : vector<8x128xf32> to vector<8x32xf32>
    %58 = vector.extract_strided_slice %55 {offsets = [0, 64], sizes = [8, 32], strides = [1, 1]} : vector<8x128xf32> to vector<8x32xf32>
    %59 = vector.extract_strided_slice %54 {offsets = [0, 96], sizes = [8, 32], strides = [1, 1]} : vector<8x128xf32> to vector<8x32xf32>
    %60 = arith.mulf %57, %44 : vector<8x32xf32>
    %61 = arith.mulf %56, %58 : vector<8x32xf32>
    %62 = arith.addf %60, %61 : vector<8x32xf32>
    %63 = math.tanh %62 : vector<8x32xf32>
    %64 = arith.mulf %59, %63 : vector<8x32xf32>
    %65 = vector.extract_strided_slice %8 {offsets = [24, 0], sizes = [8, 128], strides = [1, 1]} : vector<64x128xf32> to vector<8x128xf32>
    %cst_14 = arith.constant dense<0.000000e+00> : vector<8x128xf32>
    %66 = tpu.matmul %64, %4, %cst_14 {dimension_numbers = #tpu.dot_dimension_numbers<[1], [0], [0], [1], [0, 0, 1, 1], [], []>} : vector<8x32xf32>, vector<32x128xf32>, vector<8x128xf32> -> vector<8x128xf32>
    %67 = arith.addf %65, %66 : vector<8x128xf32>
    %68 = arith.negf %67 : vector<8x128xf32>
    %69 = math.exp %68 : vector<8x128xf32>
    %cst_15 = arith.constant 1.000000e+00 : f32
    %70 = vector.broadcast %cst_15 : f32 to vector<8x128xf32>
    %71 = arith.addf %70, %69 : vector<8x128xf32>
    %72 = arith.divf %70, %71 : vector<8x128xf32>
    %73 = math.tanh %67 : vector<8x128xf32>
    %74 = vector.extract_strided_slice %72 {offsets = [0, 0], sizes = [8, 32], strides = [1, 1]} : vector<8x128xf32> to vector<8x32xf32>
    %75 = vector.extract_strided_slice %72 {offsets = [0, 32], sizes = [8, 32], strides = [1, 1]} : vector<8x128xf32> to vector<8x32xf32>
    %76 = vector.extract_strided_slice %73 {offsets = [0, 64], sizes = [8, 32], strides = [1, 1]} : vector<8x128xf32> to vector<8x32xf32>
    %77 = vector.extract_strided_slice %72 {offsets = [0, 96], sizes = [8, 32], strides = [1, 1]} : vector<8x128xf32> to vector<8x32xf32>
    %78 = arith.mulf %75, %62 : vector<8x32xf32>
    %79 = arith.mulf %74, %76 : vector<8x32xf32>
    %80 = arith.addf %78, %79 : vector<8x32xf32>
    %81 = math.tanh %80 : vector<8x32xf32>
    %82 = arith.mulf %77, %81 : vector<8x32xf32>
    %83 = vector.extract_strided_slice %8 {offsets = [32, 0], sizes = [8, 128], strides = [1, 1]} : vector<64x128xf32> to vector<8x128xf32>
    %cst_16 = arith.constant dense<0.000000e+00> : vector<8x128xf32>
    %84 = tpu.matmul %82, %4, %cst_16 {dimension_numbers = #tpu.dot_dimension_numbers<[1], [0], [0], [1], [0, 0, 1, 1], [], []>} : vector<8x32xf32>, vector<32x128xf32>, vector<8x128xf32> -> vector<8x128xf32>
    %85 = arith.addf %83, %84 : vector<8x128xf32>
    %86 = arith.negf %85 : vector<8x128xf32>
    %87 = math.exp %86 : vector<8x128xf32>
    %cst_17 = arith.constant 1.000000e+00 : f32
    %88 = vector.broadcast %cst_17 : f32 to vector<8x128xf32>
    %89 = arith.addf %88, %87 : vector<8x128xf32>
    %90 = arith.divf %88, %89 : vector<8x128xf32>
    %91 = math.tanh %85 : vector<8x128xf32>
    %92 = vector.extract_strided_slice %90 {offsets = [0, 0], sizes = [8, 32], strides = [1, 1]} : vector<8x128xf32> to vector<8x32xf32>
    %93 = vector.extract_strided_slice %90 {offsets = [0, 32], sizes = [8, 32], strides = [1, 1]} : vector<8x128xf32> to vector<8x32xf32>
    %94 = vector.extract_strided_slice %91 {offsets = [0, 64], sizes = [8, 32], strides = [1, 1]} : vector<8x128xf32> to vector<8x32xf32>
    %95 = vector.extract_strided_slice %90 {offsets = [0, 96], sizes = [8, 32], strides = [1, 1]} : vector<8x128xf32> to vector<8x32xf32>
    %96 = arith.mulf %93, %80 : vector<8x32xf32>
    %97 = arith.mulf %92, %94 : vector<8x32xf32>
    %98 = arith.addf %96, %97 : vector<8x32xf32>
    %99 = math.tanh %98 : vector<8x32xf32>
    %100 = arith.mulf %95, %99 : vector<8x32xf32>
    %101 = vector.extract_strided_slice %8 {offsets = [40, 0], sizes = [8, 128], strides = [1, 1]} : vector<64x128xf32> to vector<8x128xf32>
    %cst_18 = arith.constant dense<0.000000e+00> : vector<8x128xf32>
    %102 = tpu.matmul %100, %4, %cst_18 {dimension_numbers = #tpu.dot_dimension_numbers<[1], [0], [0], [1], [0, 0, 1, 1], [], []>} : vector<8x32xf32>, vector<32x128xf32>, vector<8x128xf32> -> vector<8x128xf32>
    %103 = arith.addf %101, %102 : vector<8x128xf32>
    %104 = arith.negf %103 : vector<8x128xf32>
    %105 = math.exp %104 : vector<8x128xf32>
    %cst_19 = arith.constant 1.000000e+00 : f32
    %106 = vector.broadcast %cst_19 : f32 to vector<8x128xf32>
    %107 = arith.addf %106, %105 : vector<8x128xf32>
    %108 = arith.divf %106, %107 : vector<8x128xf32>
    %109 = math.tanh %103 : vector<8x128xf32>
    %110 = vector.extract_strided_slice %108 {offsets = [0, 0], sizes = [8, 32], strides = [1, 1]} : vector<8x128xf32> to vector<8x32xf32>
    %111 = vector.extract_strided_slice %108 {offsets = [0, 32], sizes = [8, 32], strides = [1, 1]} : vector<8x128xf32> to vector<8x32xf32>
    %112 = vector.extract_strided_slice %109 {offsets = [0, 64], sizes = [8, 32], strides = [1, 1]} : vector<8x128xf32> to vector<8x32xf32>
    %113 = vector.extract_strided_slice %108 {offsets = [0, 96], sizes = [8, 32], strides = [1, 1]} : vector<8x128xf32> to vector<8x32xf32>
    %114 = arith.mulf %111, %98 : vector<8x32xf32>
    %115 = arith.mulf %110, %112 : vector<8x32xf32>
    %116 = arith.addf %114, %115 : vector<8x32xf32>
    %117 = math.tanh %116 : vector<8x32xf32>
    %118 = arith.mulf %113, %117 : vector<8x32xf32>
    %119 = vector.extract_strided_slice %8 {offsets = [48, 0], sizes = [8, 128], strides = [1, 1]} : vector<64x128xf32> to vector<8x128xf32>
    %cst_20 = arith.constant dense<0.000000e+00> : vector<8x128xf32>
    %120 = tpu.matmul %118, %4, %cst_20 {dimension_numbers = #tpu.dot_dimension_numbers<[1], [0], [0], [1], [0, 0, 1, 1], [], []>} : vector<8x32xf32>, vector<32x128xf32>, vector<8x128xf32> -> vector<8x128xf32>
    %121 = arith.addf %119, %120 : vector<8x128xf32>
    %122 = arith.negf %121 : vector<8x128xf32>
    %123 = math.exp %122 : vector<8x128xf32>
    %cst_21 = arith.constant 1.000000e+00 : f32
    %124 = vector.broadcast %cst_21 : f32 to vector<8x128xf32>
    %125 = arith.addf %124, %123 : vector<8x128xf32>
    %126 = arith.divf %124, %125 : vector<8x128xf32>
    %127 = math.tanh %121 : vector<8x128xf32>
    %128 = vector.extract_strided_slice %126 {offsets = [0, 0], sizes = [8, 32], strides = [1, 1]} : vector<8x128xf32> to vector<8x32xf32>
    %129 = vector.extract_strided_slice %126 {offsets = [0, 32], sizes = [8, 32], strides = [1, 1]} : vector<8x128xf32> to vector<8x32xf32>
    %130 = vector.extract_strided_slice %127 {offsets = [0, 64], sizes = [8, 32], strides = [1, 1]} : vector<8x128xf32> to vector<8x32xf32>
    %131 = vector.extract_strided_slice %126 {offsets = [0, 96], sizes = [8, 32], strides = [1, 1]} : vector<8x128xf32> to vector<8x32xf32>
    %132 = arith.mulf %129, %116 : vector<8x32xf32>
    %133 = arith.mulf %128, %130 : vector<8x32xf32>
    %134 = arith.addf %132, %133 : vector<8x32xf32>
    %135 = math.tanh %134 : vector<8x32xf32>
    %136 = arith.mulf %131, %135 : vector<8x32xf32>
    %137 = vector.extract_strided_slice %8 {offsets = [56, 0], sizes = [8, 128], strides = [1, 1]} : vector<64x128xf32> to vector<8x128xf32>
    %cst_22 = arith.constant dense<0.000000e+00> : vector<8x128xf32>
    %138 = tpu.matmul %136, %4, %cst_22 {dimension_numbers = #tpu.dot_dimension_numbers<[1], [0], [0], [1], [0, 0, 1, 1], [], []>} : vector<8x32xf32>, vector<32x128xf32>, vector<8x128xf32> -> vector<8x128xf32>
    %139 = arith.addf %137, %138 : vector<8x128xf32>
    %140 = arith.negf %139 : vector<8x128xf32>
    %141 = math.exp %140 : vector<8x128xf32>
    %cst_23 = arith.constant 1.000000e+00 : f32
    %142 = vector.broadcast %cst_23 : f32 to vector<8x128xf32>
    %143 = arith.addf %142, %141 : vector<8x128xf32>
    %144 = arith.divf %142, %143 : vector<8x128xf32>
    %145 = math.tanh %139 : vector<8x128xf32>
    %146 = vector.extract_strided_slice %144 {offsets = [0, 0], sizes = [8, 32], strides = [1, 1]} : vector<8x128xf32> to vector<8x32xf32>
    %147 = vector.extract_strided_slice %144 {offsets = [0, 32], sizes = [8, 32], strides = [1, 1]} : vector<8x128xf32> to vector<8x32xf32>
    %148 = vector.extract_strided_slice %145 {offsets = [0, 64], sizes = [8, 32], strides = [1, 1]} : vector<8x128xf32> to vector<8x32xf32>
    %149 = vector.extract_strided_slice %144 {offsets = [0, 96], sizes = [8, 32], strides = [1, 1]} : vector<8x128xf32> to vector<8x32xf32>
    %150 = arith.mulf %147, %134 : vector<8x32xf32>
    %151 = arith.mulf %146, %148 : vector<8x32xf32>
    %152 = arith.addf %150, %151 : vector<8x32xf32>
    %153 = math.tanh %152 : vector<8x32xf32>
    %154 = arith.mulf %149, %153 : vector<8x32xf32>
    %155 = tpu.concatenate %28, %46, %64, %82, %100, %118, %136, %154 in 0 : vector<8x32xf32>, vector<8x32xf32>, vector<8x32xf32>, vector<8x32xf32>, vector<8x32xf32>, vector<8x32xf32>, vector<8x32xf32>, vector<8x32xf32> -> vector<64x32xf32>
    %c1 = arith.constant 1 : index
    %c0_24 = arith.constant 0 : index
    %c0_25 = arith.constant 0 : index
    %156 = vector.load %arg2[%c1, %c0_24, %c0_25] : memref<2x64x128xf32, #tpu.memory_space<vmem>>, vector<1x64x128xf32>
    %157 = vector.shape_cast %156 : vector<1x64x128xf32> to vector<64x128xf32>
    %158 = vector.extract_strided_slice %157 {offsets = [0, 0], sizes = [32, 128], strides = [1, 1]} : vector<64x128xf32> to vector<32x128xf32>
    %159 = vector.extract_strided_slice %157 {offsets = [32, 0], sizes = [32, 128], strides = [1, 1]} : vector<64x128xf32> to vector<32x128xf32>
    %c1_26 = arith.constant 1 : index
    %c0_27 = arith.constant 0 : index
    %160 = vector.load %arg3[%c1_26, %c0_27] : memref<3x128xf32, #tpu.memory_space<vmem>>, vector<1x128xf32>
    %cst_28 = arith.constant dense<0.000000e+00> : vector<64x128xf32>
    %161 = tpu.matmul %155, %158, %cst_28 {dimension_numbers = #tpu.dot_dimension_numbers<[1], [0], [0], [1], [0, 0, 1, 1], [], []>} : vector<64x32xf32>, vector<32x128xf32>, vector<64x128xf32> -> vector<64x128xf32>
    %162 = vector.broadcast %160 : vector<1x128xf32> to vector<64x128xf32>
    %163 = arith.addf %161, %162 : vector<64x128xf32>
    %cst_29 = arith.constant 0.000000e+00 : f32
    %164 = vector.broadcast %cst_29 : f32 to vector<8x32xf32>
    %cst_30 = arith.constant 0.000000e+00 : f32
    %165 = vector.broadcast %cst_30 : f32 to vector<8x32xf32>
    %166 = vector.extract_strided_slice %163 {offsets = [0, 0], sizes = [8, 128], strides = [1, 1]} : vector<64x128xf32> to vector<8x128xf32>
    %cst_31 = arith.constant dense<0.000000e+00> : vector<8x128xf32>
    %167 = tpu.matmul %164, %159, %cst_31 {dimension_numbers = #tpu.dot_dimension_numbers<[1], [0], [0], [1], [0, 0, 1, 1], [], []>} : vector<8x32xf32>, vector<32x128xf32>, vector<8x128xf32> -> vector<8x128xf32>
    %168 = arith.addf %166, %167 : vector<8x128xf32>
    %169 = arith.negf %168 : vector<8x128xf32>
    %170 = math.exp %169 : vector<8x128xf32>
    %cst_32 = arith.constant 1.000000e+00 : f32
    %171 = vector.broadcast %cst_32 : f32 to vector<8x128xf32>
    %172 = arith.addf %171, %170 : vector<8x128xf32>
    %173 = arith.divf %171, %172 : vector<8x128xf32>
    %174 = math.tanh %168 : vector<8x128xf32>
    %175 = vector.extract_strided_slice %173 {offsets = [0, 0], sizes = [8, 32], strides = [1, 1]} : vector<8x128xf32> to vector<8x32xf32>
    %176 = vector.extract_strided_slice %173 {offsets = [0, 32], sizes = [8, 32], strides = [1, 1]} : vector<8x128xf32> to vector<8x32xf32>
    %177 = vector.extract_strided_slice %174 {offsets = [0, 64], sizes = [8, 32], strides = [1, 1]} : vector<8x128xf32> to vector<8x32xf32>
    %178 = vector.extract_strided_slice %173 {offsets = [0, 96], sizes = [8, 32], strides = [1, 1]} : vector<8x128xf32> to vector<8x32xf32>
    %179 = arith.mulf %176, %165 : vector<8x32xf32>
    %180 = arith.mulf %175, %177 : vector<8x32xf32>
    %181 = arith.addf %179, %180 : vector<8x32xf32>
    %182 = math.tanh %181 : vector<8x32xf32>
    %183 = arith.mulf %178, %182 : vector<8x32xf32>
    %184 = vector.extract_strided_slice %163 {offsets = [8, 0], sizes = [8, 128], strides = [1, 1]} : vector<64x128xf32> to vector<8x128xf32>
    %cst_33 = arith.constant dense<0.000000e+00> : vector<8x128xf32>
    %185 = tpu.matmul %183, %159, %cst_33 {dimension_numbers = #tpu.dot_dimension_numbers<[1], [0], [0], [1], [0, 0, 1, 1], [], []>} : vector<8x32xf32>, vector<32x128xf32>, vector<8x128xf32> -> vector<8x128xf32>
    %186 = arith.addf %184, %185 : vector<8x128xf32>
    %187 = arith.negf %186 : vector<8x128xf32>
    %188 = math.exp %187 : vector<8x128xf32>
    %cst_34 = arith.constant 1.000000e+00 : f32
    %189 = vector.broadcast %cst_34 : f32 to vector<8x128xf32>
    %190 = arith.addf %189, %188 : vector<8x128xf32>
    %191 = arith.divf %189, %190 : vector<8x128xf32>
    %192 = math.tanh %186 : vector<8x128xf32>
    %193 = vector.extract_strided_slice %191 {offsets = [0, 0], sizes = [8, 32], strides = [1, 1]} : vector<8x128xf32> to vector<8x32xf32>
    %194 = vector.extract_strided_slice %191 {offsets = [0, 32], sizes = [8, 32], strides = [1, 1]} : vector<8x128xf32> to vector<8x32xf32>
    %195 = vector.extract_strided_slice %192 {offsets = [0, 64], sizes = [8, 32], strides = [1, 1]} : vector<8x128xf32> to vector<8x32xf32>
    %196 = vector.extract_strided_slice %191 {offsets = [0, 96], sizes = [8, 32], strides = [1, 1]} : vector<8x128xf32> to vector<8x32xf32>
    %197 = arith.mulf %194, %181 : vector<8x32xf32>
    %198 = arith.mulf %193, %195 : vector<8x32xf32>
    %199 = arith.addf %197, %198 : vector<8x32xf32>
    %200 = math.tanh %199 : vector<8x32xf32>
    %201 = arith.mulf %196, %200 : vector<8x32xf32>
    %202 = vector.extract_strided_slice %163 {offsets = [16, 0], sizes = [8, 128], strides = [1, 1]} : vector<64x128xf32> to vector<8x128xf32>
    %cst_35 = arith.constant dense<0.000000e+00> : vector<8x128xf32>
    %203 = tpu.matmul %201, %159, %cst_35 {dimension_numbers = #tpu.dot_dimension_numbers<[1], [0], [0], [1], [0, 0, 1, 1], [], []>} : vector<8x32xf32>, vector<32x128xf32>, vector<8x128xf32> -> vector<8x128xf32>
    %204 = arith.addf %202, %203 : vector<8x128xf32>
    %205 = arith.negf %204 : vector<8x128xf32>
    %206 = math.exp %205 : vector<8x128xf32>
    %cst_36 = arith.constant 1.000000e+00 : f32
    %207 = vector.broadcast %cst_36 : f32 to vector<8x128xf32>
    %208 = arith.addf %207, %206 : vector<8x128xf32>
    %209 = arith.divf %207, %208 : vector<8x128xf32>
    %210 = math.tanh %204 : vector<8x128xf32>
    %211 = vector.extract_strided_slice %209 {offsets = [0, 0], sizes = [8, 32], strides = [1, 1]} : vector<8x128xf32> to vector<8x32xf32>
    %212 = vector.extract_strided_slice %209 {offsets = [0, 32], sizes = [8, 32], strides = [1, 1]} : vector<8x128xf32> to vector<8x32xf32>
    %213 = vector.extract_strided_slice %210 {offsets = [0, 64], sizes = [8, 32], strides = [1, 1]} : vector<8x128xf32> to vector<8x32xf32>
    %214 = vector.extract_strided_slice %209 {offsets = [0, 96], sizes = [8, 32], strides = [1, 1]} : vector<8x128xf32> to vector<8x32xf32>
    %215 = arith.mulf %212, %199 : vector<8x32xf32>
    %216 = arith.mulf %211, %213 : vector<8x32xf32>
    %217 = arith.addf %215, %216 : vector<8x32xf32>
    %218 = math.tanh %217 : vector<8x32xf32>
    %219 = arith.mulf %214, %218 : vector<8x32xf32>
    %220 = vector.extract_strided_slice %163 {offsets = [24, 0], sizes = [8, 128], strides = [1, 1]} : vector<64x128xf32> to vector<8x128xf32>
    %cst_37 = arith.constant dense<0.000000e+00> : vector<8x128xf32>
    %221 = tpu.matmul %219, %159, %cst_37 {dimension_numbers = #tpu.dot_dimension_numbers<[1], [0], [0], [1], [0, 0, 1, 1], [], []>} : vector<8x32xf32>, vector<32x128xf32>, vector<8x128xf32> -> vector<8x128xf32>
    %222 = arith.addf %220, %221 : vector<8x128xf32>
    %223 = arith.negf %222 : vector<8x128xf32>
    %224 = math.exp %223 : vector<8x128xf32>
    %cst_38 = arith.constant 1.000000e+00 : f32
    %225 = vector.broadcast %cst_38 : f32 to vector<8x128xf32>
    %226 = arith.addf %225, %224 : vector<8x128xf32>
    %227 = arith.divf %225, %226 : vector<8x128xf32>
    %228 = math.tanh %222 : vector<8x128xf32>
    %229 = vector.extract_strided_slice %227 {offsets = [0, 0], sizes = [8, 32], strides = [1, 1]} : vector<8x128xf32> to vector<8x32xf32>
    %230 = vector.extract_strided_slice %227 {offsets = [0, 32], sizes = [8, 32], strides = [1, 1]} : vector<8x128xf32> to vector<8x32xf32>
    %231 = vector.extract_strided_slice %228 {offsets = [0, 64], sizes = [8, 32], strides = [1, 1]} : vector<8x128xf32> to vector<8x32xf32>
    %232 = vector.extract_strided_slice %227 {offsets = [0, 96], sizes = [8, 32], strides = [1, 1]} : vector<8x128xf32> to vector<8x32xf32>
    %233 = arith.mulf %230, %217 : vector<8x32xf32>
    %234 = arith.mulf %229, %231 : vector<8x32xf32>
    %235 = arith.addf %233, %234 : vector<8x32xf32>
    %236 = math.tanh %235 : vector<8x32xf32>
    %237 = arith.mulf %232, %236 : vector<8x32xf32>
    %238 = vector.extract_strided_slice %163 {offsets = [32, 0], sizes = [8, 128], strides = [1, 1]} : vector<64x128xf32> to vector<8x128xf32>
    %cst_39 = arith.constant dense<0.000000e+00> : vector<8x128xf32>
    %239 = tpu.matmul %237, %159, %cst_39 {dimension_numbers = #tpu.dot_dimension_numbers<[1], [0], [0], [1], [0, 0, 1, 1], [], []>} : vector<8x32xf32>, vector<32x128xf32>, vector<8x128xf32> -> vector<8x128xf32>
    %240 = arith.addf %238, %239 : vector<8x128xf32>
    %241 = arith.negf %240 : vector<8x128xf32>
    %242 = math.exp %241 : vector<8x128xf32>
    %cst_40 = arith.constant 1.000000e+00 : f32
    %243 = vector.broadcast %cst_40 : f32 to vector<8x128xf32>
    %244 = arith.addf %243, %242 : vector<8x128xf32>
    %245 = arith.divf %243, %244 : vector<8x128xf32>
    %246 = math.tanh %240 : vector<8x128xf32>
    %247 = vector.extract_strided_slice %245 {offsets = [0, 0], sizes = [8, 32], strides = [1, 1]} : vector<8x128xf32> to vector<8x32xf32>
    %248 = vector.extract_strided_slice %245 {offsets = [0, 32], sizes = [8, 32], strides = [1, 1]} : vector<8x128xf32> to vector<8x32xf32>
    %249 = vector.extract_strided_slice %246 {offsets = [0, 64], sizes = [8, 32], strides = [1, 1]} : vector<8x128xf32> to vector<8x32xf32>
    %250 = vector.extract_strided_slice %245 {offsets = [0, 96], sizes = [8, 32], strides = [1, 1]} : vector<8x128xf32> to vector<8x32xf32>
    %251 = arith.mulf %248, %235 : vector<8x32xf32>
    %252 = arith.mulf %247, %249 : vector<8x32xf32>
    %253 = arith.addf %251, %252 : vector<8x32xf32>
    %254 = math.tanh %253 : vector<8x32xf32>
    %255 = arith.mulf %250, %254 : vector<8x32xf32>
    %256 = vector.extract_strided_slice %163 {offsets = [40, 0], sizes = [8, 128], strides = [1, 1]} : vector<64x128xf32> to vector<8x128xf32>
    %cst_41 = arith.constant dense<0.000000e+00> : vector<8x128xf32>
    %257 = tpu.matmul %255, %159, %cst_41 {dimension_numbers = #tpu.dot_dimension_numbers<[1], [0], [0], [1], [0, 0, 1, 1], [], []>} : vector<8x32xf32>, vector<32x128xf32>, vector<8x128xf32> -> vector<8x128xf32>
    %258 = arith.addf %256, %257 : vector<8x128xf32>
    %259 = arith.negf %258 : vector<8x128xf32>
    %260 = math.exp %259 : vector<8x128xf32>
    %cst_42 = arith.constant 1.000000e+00 : f32
    %261 = vector.broadcast %cst_42 : f32 to vector<8x128xf32>
    %262 = arith.addf %261, %260 : vector<8x128xf32>
    %263 = arith.divf %261, %262 : vector<8x128xf32>
    %264 = math.tanh %258 : vector<8x128xf32>
    %265 = vector.extract_strided_slice %263 {offsets = [0, 0], sizes = [8, 32], strides = [1, 1]} : vector<8x128xf32> to vector<8x32xf32>
    %266 = vector.extract_strided_slice %263 {offsets = [0, 32], sizes = [8, 32], strides = [1, 1]} : vector<8x128xf32> to vector<8x32xf32>
    %267 = vector.extract_strided_slice %264 {offsets = [0, 64], sizes = [8, 32], strides = [1, 1]} : vector<8x128xf32> to vector<8x32xf32>
    %268 = vector.extract_strided_slice %263 {offsets = [0, 96], sizes = [8, 32], strides = [1, 1]} : vector<8x128xf32> to vector<8x32xf32>
    %269 = arith.mulf %266, %253 : vector<8x32xf32>
    %270 = arith.mulf %265, %267 : vector<8x32xf32>
    %271 = arith.addf %269, %270 : vector<8x32xf32>
    %272 = math.tanh %271 : vector<8x32xf32>
    %273 = arith.mulf %268, %272 : vector<8x32xf32>
    %274 = vector.extract_strided_slice %163 {offsets = [48, 0], sizes = [8, 128], strides = [1, 1]} : vector<64x128xf32> to vector<8x128xf32>
    %cst_43 = arith.constant dense<0.000000e+00> : vector<8x128xf32>
    %275 = tpu.matmul %273, %159, %cst_43 {dimension_numbers = #tpu.dot_dimension_numbers<[1], [0], [0], [1], [0, 0, 1, 1], [], []>} : vector<8x32xf32>, vector<32x128xf32>, vector<8x128xf32> -> vector<8x128xf32>
    %276 = arith.addf %274, %275 : vector<8x128xf32>
    %277 = arith.negf %276 : vector<8x128xf32>
    %278 = math.exp %277 : vector<8x128xf32>
    %cst_44 = arith.constant 1.000000e+00 : f32
    %279 = vector.broadcast %cst_44 : f32 to vector<8x128xf32>
    %280 = arith.addf %279, %278 : vector<8x128xf32>
    %281 = arith.divf %279, %280 : vector<8x128xf32>
    %282 = math.tanh %276 : vector<8x128xf32>
    %283 = vector.extract_strided_slice %281 {offsets = [0, 0], sizes = [8, 32], strides = [1, 1]} : vector<8x128xf32> to vector<8x32xf32>
    %284 = vector.extract_strided_slice %281 {offsets = [0, 32], sizes = [8, 32], strides = [1, 1]} : vector<8x128xf32> to vector<8x32xf32>
    %285 = vector.extract_strided_slice %282 {offsets = [0, 64], sizes = [8, 32], strides = [1, 1]} : vector<8x128xf32> to vector<8x32xf32>
    %286 = vector.extract_strided_slice %281 {offsets = [0, 96], sizes = [8, 32], strides = [1, 1]} : vector<8x128xf32> to vector<8x32xf32>
    %287 = arith.mulf %284, %271 : vector<8x32xf32>
    %288 = arith.mulf %283, %285 : vector<8x32xf32>
    %289 = arith.addf %287, %288 : vector<8x32xf32>
    %290 = math.tanh %289 : vector<8x32xf32>
    %291 = arith.mulf %286, %290 : vector<8x32xf32>
    %292 = vector.extract_strided_slice %163 {offsets = [56, 0], sizes = [8, 128], strides = [1, 1]} : vector<64x128xf32> to vector<8x128xf32>
    %cst_45 = arith.constant dense<0.000000e+00> : vector<8x128xf32>
    %293 = tpu.matmul %291, %159, %cst_45 {dimension_numbers = #tpu.dot_dimension_numbers<[1], [0], [0], [1], [0, 0, 1, 1], [], []>} : vector<8x32xf32>, vector<32x128xf32>, vector<8x128xf32> -> vector<8x128xf32>
    %294 = arith.addf %292, %293 : vector<8x128xf32>
    %295 = arith.negf %294 : vector<8x128xf32>
    %296 = math.exp %295 : vector<8x128xf32>
    %cst_46 = arith.constant 1.000000e+00 : f32
    %297 = vector.broadcast %cst_46 : f32 to vector<8x128xf32>
    %298 = arith.addf %297, %296 : vector<8x128xf32>
    %299 = arith.divf %297, %298 : vector<8x128xf32>
    %300 = math.tanh %294 : vector<8x128xf32>
    %301 = vector.extract_strided_slice %299 {offsets = [0, 0], sizes = [8, 32], strides = [1, 1]} : vector<8x128xf32> to vector<8x32xf32>
    %302 = vector.extract_strided_slice %299 {offsets = [0, 32], sizes = [8, 32], strides = [1, 1]} : vector<8x128xf32> to vector<8x32xf32>
    %303 = vector.extract_strided_slice %300 {offsets = [0, 64], sizes = [8, 32], strides = [1, 1]} : vector<8x128xf32> to vector<8x32xf32>
    %304 = vector.extract_strided_slice %299 {offsets = [0, 96], sizes = [8, 32], strides = [1, 1]} : vector<8x128xf32> to vector<8x32xf32>
    %305 = arith.mulf %302, %289 : vector<8x32xf32>
    %306 = arith.mulf %301, %303 : vector<8x32xf32>
    %307 = arith.addf %305, %306 : vector<8x32xf32>
    %308 = math.tanh %307 : vector<8x32xf32>
    %309 = arith.mulf %304, %308 : vector<8x32xf32>
    %c2 = arith.constant 2 : index
    %c0_47 = arith.constant 0 : index
    %310 = vector.load %arg3[%c2, %c0_47] : memref<3x128xf32, #tpu.memory_space<vmem>>, vector<1x32xf32>
    %c2_48 = arith.constant 2 : index
    %c32 = arith.constant 32 : index
    %311 = vector.load %arg3[%c2_48, %c32] : memref<3x128xf32, #tpu.memory_space<vmem>>, vector<1x1xf32>
    %312 = vector.broadcast %310 : vector<1x32xf32> to vector<8x32xf32>
    %313 = arith.mulf %309, %312 : vector<8x32xf32>
    %cst_49 = arith.constant dense<0.000000e+00> : vector<8xf32>
    %314 = vector.multi_reduction <add>, %313, %cst_49 [1] : vector<8x32xf32> to vector<8xf32>
    %315 = vector.shape_cast %314 : vector<8xf32> to vector<8x1xf32>
    %316 = vector.broadcast %311 : vector<1x1xf32> to vector<8x1xf32>
    %317 = arith.addf %315, %316 : vector<8x1xf32>
    %c0_50 = arith.constant 0 : index
    %c0_51 = arith.constant 0 : index
    %318 = vector.load %arg4[%c0_50, %c0_51] : memref<8x1xf32, #tpu.memory_space<vmem>>, vector<8x1xf32>
    tpu.vector_store %arg4[%c0_50, %c0_51], %317 {strides = array<i32>} : memref<8x1xf32, #tpu.memory_space<vmem>>, vector<8x1xf32>,
    return
  }
  func.func @transform_0(%arg0: i32) -> (i32, i32) {
    %c0_i32 = arith.constant 0 : i32
    %c0_i32_0 = arith.constant 0 : i32
    %c0_i32_1 = arith.constant 0 : i32
    return %c0_i32, %c0_i32_0 : i32, i32
  }
  func.func @transform_1(%arg0: i32) -> (i32, i32, i32) {
    %c0_i32 = arith.constant 0 : i32
    %c0_i32_0 = arith.constant 0 : i32
    %c0_i32_1 = arith.constant 0 : i32
    %c0_i32_2 = arith.constant 0 : i32
    return %c0_i32, %c0_i32_0, %c0_i32_1 : i32, i32, i32
  }
  func.func @transform_2(%arg0: i32) -> (i32, i32) {
    %c0_i32 = arith.constant 0 : i32
    %c0_i32_0 = arith.constant 0 : i32
    %c0_i32_1 = arith.constant 0 : i32
    return %c0_i32, %c0_i32_0 : i32, i32
  }
  func.func @transform_3(%arg0: i32) -> (i32, i32) {
    %c0_i32 = arith.constant 0 : i32
    %c0_i32_0 = arith.constant 0 : i32
    %c0_i32_1 = arith.constant 0 : i32
    return %c0_i32, %c0_i32_0 : i32, i32
  }
}

</mosaic_0001>

<llo_original>
// kernel: tpu_custom_call.1
$region0: #{tpu_custom_call.1}
  #allocation0 [shape = 'u32[]', space=smem, size = 0x4, offset = 0x4, fixed_abs, tag = 'smem constant byte address 0x4 - core index']
  #allocation1 [shape = 'u32[72,128]{1,0:T(1,128)}', space=vmem, size = 0x9000, scoped, tag = 'internal scratch']
  %s0 = inlined_call_operand.vmem [shape: f32[64,4], index: 0, kind: input, shape index: {}]
  %s1 = inlined_call_operand.hbm [shape: f32[2,64,128], index: 1, kind: input, shape index: {}]
  %s2 = inlined_call_operand.vmem [shape: f32[3,128], index: 2, kind: input, shape index: {}]
  %s3 = inlined_call_operand.vmem [shape: f32[8,1], index: 3, kind: output, shape index: {}]
  %s4 = sld [smem:[#allocation0]]
  $region26: #{tpu_custom_call.1} parent=0
    _
  %s6 = ssub.s32 1, %s4
  %s7 = scalar_select 0, %s6, %s4
  $region1: #{tpu_custom_call.1} parent=0
    #allocation2 [shape = 'u8[65536]{0}', space=vmem, size = 0x10000, scoped, tag = 'input window, operand 1, single buffered']
    #allocation3 [shape = 's32[1]{0}', space=sflag, size = 0x4, scoped, tag = 'scoped memory for tpu_custom_call.1']
    %8 = vsyncpa [#allocation3], 0
    // Predicated region
    $region2: #{tpu_custom_call.1} parent=1 // pred_check
      _
    $region3: #{tpu_custom_call.1} parent=1 // pred_check_branch
      %10 = sbr.rel (0) target = $region5
    $region4: #{tpu_custom_call.1} parent=1 // pred_region
      _
    $region5: #{tpu_custom_call.1} parent=1 // pred_fallthru
      _
    // Predicated region
    $region6: #{tpu_custom_call.1} parent=1 // pred_check
      _
    $region7: #{tpu_custom_call.1} parent=1 // pred_check_branch
      %12 = sbr.rel (0) target = $region9
    $region8: #{tpu_custom_call.1} parent=1 // pred_region
      %14 = vsyncadd [#allocation3], 0
      %s15 = sshll.u32 %s1, 4
      %s16 = int_to_ptr.hbm [resolvable:$true] %s15
      %s17 = sshll.u32 [#allocation2], 4
      %s18 = int_to_ptr.vmem [resolvable:$true] %s17
      %23 = dma.hbm_to_vmem [thread:$0]  %s16, 2048, %s18, [#allocation3], 128, 128, 8
    $region9: #{tpu_custom_call.1} parent=1 // pred_fallthru
      _
    // Predicated region
    $region10: #{tpu_custom_call.1} parent=1 // pred_check
      _
    $region11: #{tpu_custom_call.1} parent=1 // pred_check_branch
      %25 = sbr.rel (0) target = $region13
    $region12: #{tpu_custom_call.1} parent=1 // pred_region
      _
    $region13: #{tpu_custom_call.1} parent=1 // pred_fallthru
      _
    // Predicated region
    $region14: #{tpu_custom_call.1} parent=1 // pred_check
      _
    $region15: #{tpu_custom_call.1} parent=1 // pred_check_branch
      %27 = sbr.rel (0) target = $region17
    $region16: #{tpu_custom_call.1} parent=1 // pred_region
      %29 = dma.done [#allocation3], 2048
    $region17: #{tpu_custom_call.1} parent=1 // pred_fallthru
      _
    %v30 = vld [vmem:[%s0] sm:$0xff]
    %v31 = vld [vmem:[%s0 + $0x8] sm:$0xff]
    %v32 = vld [vmem:[%s0 + $0x10] sm:$0xff]
    %v33 = vld [vmem:[%s0 + $0x18] sm:$0xff]
    %v34 = vld [vmem:[%s0 + $0x20] sm:$0xff]
    %v35 = vld [vmem:[%s0 + $0x28] sm:$0xff]
    %v36 = vld [vmem:[%s0 + $0x30] sm:$0xff]
    %v37 = vld [vmem:[%s0 + $0x38] sm:$0xff]
    %v38 = vld [vmem:[#allocation2] sm:$0xff]
    %v39 = vld [vmem:[#allocation2 + $0x8] sm:$0xff]
    %v40 = vld [vmem:[#allocation2 + $0x10] sm:$0xff]
    %v41 = vld [vmem:[#allocation2 + $0x18] sm:$0xff]
    %v42 = vld [vmem:[#allocation2 + $0x20] sm:$0xff]
    %v43 = vld [vmem:[%s2] sm:$0x1]
    %v44 = vperm.slane %v43, 0
    %vm45 = vcmask 31744
    %v47 = vsel %vm45, %v30, 0
    %v50 = vsel %vm45, %v31, 0
    %v53 = vsel %vm45, %v32, 0
    %v56 = vsel %vm45, %v33, 0
    %v59 = vsel %vm45, %v34, 0
    %v62 = vsel %vm45, %v35, 0
    %v65 = vsel %vm45, %v36, 0
    %v68 = vsel %vm45, %v37, 0
    %vm70 = vcmask 1043456
    %v72 = vsel %vm70, %v38, 0
    %74 = vmatpush.msra.mxu0 0.0
    %75 = vmatpush.msra.mxu0 0.0
    %76 = vmatpush.msra.mxu0 0.0
    %77 = vmatpush.msra.mxu0 0.0
    %78 = vmatpush.msra.mxu0 0.0
    %79 = vmatpush.msra.mxu0 0.0
    %80 = vmatpush.msra.mxu0 0.0
    %81 = vmatpush.msra.mxu0 0.0
    %82 = vmatpush.msra.mxu0 0.0
    %83 = vmatpush.msra.mxu0 0.0
    %84 = vmatpush.msra.mxu0 0.0
    %85 = vmatpush.msra.mxu0 0.0
    %86 = vmatpush.msra.mxu0 0.0
    %87 = vmatpush.msra.mxu0 0.0
    %88 = vmatpush.msra.mxu0 0.0
    %89 = vmatpush.msra.mxu0 %v72
    %90 = vmatmul.f32.gmra.mxu0 %v47
    %v91 = vpop.f32.mrf.mxu0
    %v92 = vadd.f32 %v44, %v91
    %93 = vmatmul.f32.gmra.mxu0 %v50
    %v94 = vpop.f32.mrf.mxu0
    %v95 = vadd.f32 %v44, %v94
    %96 = vmatmul.f32.gmra.mxu0 %v53
    %v97 = vpop.f32.mrf.mxu0
    %v98 = vadd.f32 %v44, %v97
    %99 = vmatmul.f32.gmra.mxu0 %v56
    %v100 = vpop.f32.mrf.mxu0
    %v101 = vadd.f32 %v44, %v100
    %102 = vmatmul.f32.gmra.mxu0 %v59
    %v103 = vpop.f32.mrf.mxu0
    %v104 = vadd.f32 %v44, %v103
    %105 = vmatmul.f32.gmra.mxu0 %v62
    %v106 = vpop.f32.mrf.mxu0
    %v107 = vadd.f32 %v44, %v106
    %108 = vmatmul.f32.gmra.mxu0 %v65
    %v109 = vpop.f32.mrf.mxu0
    %v110 = vadd.f32 %v44, %v109
    %111 = vmatmul.f32.gmra.mxu0 %v68
    %v112 = vpop.f32.mrf.mxu0
    %v113 = vadd.f32 %v44, %v112
    %114 = vdwg.mxu0
    %v119 = vrot.slane %v38, 4
    %v120 = vrot.slane %v39, 4
    %v121 = vsel %vm70, %v119, %v120
    %v122 = vrot.slane %v40, 4
    %v123 = vsel %vm70, %v120, %v122
    %v124 = vrot.slane %v41, 4
    %v125 = vsel %vm70, %v122, %v124
    %v126 = vrot.slane %v42, 4
    %v127 = vsel %vm70, %v124, %v126
    %vm132 = vcmask 261120
    %v134 = vsel %vm132, 0.0, 0
    %136 = vmatpush.msra.mxu0 0.0
    %137 = vmatpush.msra.mxu0 0.0
    %138 = vmatpush.msra.mxu0 0.0
    %139 = vmatpush.msra.mxu0 0.0
    %140 = vmatpush.msra.mxu0 0.0
    %141 = vmatpush.msra.mxu0 0.0
    %142 = vmatpush.msra.mxu0 0.0
    %143 = vmatpush.msra.mxu0 0.0
    %144 = vmatpush.msra.mxu0 0.0
    %145 = vmatpush.msra.mxu0 0.0
    %146 = vmatpush.msra.mxu0 0.0
    %147 = vmatpush.msra.mxu0 0.0
    %148 = vmatpush.msra.mxu0 %v127
    %149 = vmatpush.msra.mxu0 %v125
    %150 = vmatpush.msra.mxu0 %v123
    %151 = vmatpush.msra.mxu0 %v121
    %152 = vmatmul.f32.gmra.mxu0 %v134
    %v153 = vpop.f32.mrf.mxu0
    %v154 = vadd.f32 0.0, %v153
    %155 = vdwg.mxu0
    %v156 = vadd.f32 %v92, %v154
    %v157 = vxor.u32 %v156, 2147483648
    %v158 = vmul.f32 %v157, 1.442695
    %v159 = vpow.pop %v158
    %v160 = vadd.f32 %v159, 1.0
    %v161 = vrcp.pop %v160
    %v162 = vmul.f32 %v160, %v161
    %v163 = vsub.f32 1.0, %v162
    %v164 = vmul.f32 %v161, %v163
    %v165 = vadd.f32 %v161, %v164
    %vm166 = vweird.f32 %v160
    %vm167 = vweird.f32 %v161
    %vm168 = vmor %vm166, %vm167
    %v169 = vsel %vm168, %v161, %v165
    %v170 = vand.u32 2147483647, %v160
    %vm171 = vcmp.eq.f32.partialorder %v170, 8.507059e+37
    %v172 = vand.u32 %v160, 2147483648
    %v173 = vor.u32 1.1754944e-38, %v172
    %v174 = vsel %vm171, %v173, %v169
    %v175 = vmul.f32 1.0, %v174
    %v176 = vtanh.pop %v156
    %v177 = vmul.f32 %v175, 0.0
    %179 = vrot.lane.b32.xlu0 %v176, 64
    %v180 = vpop.permute.xlu0 %179
    %v182 = vmul.f32 %v175, %v180
    %184 = vrot.lane.b32.xlu0 %v182, 32
    %v185 = vpop.permute.xlu0 %184
    %v187 = vadd.f32 %v177, %v185
    %v188 = vtanh.pop %v187
    %190 = vrot.lane.b32.xlu0 %v188, 64
    %v191 = vpop.permute.xlu0 %190
    %v193 = vmul.f32 %v175, %v191
    %195 = vrot.lane.b32.xlu0 %v193, 32
    %v196 = vpop.permute.xlu0 %195
    %v197 = vsel %vm132, %v196, 0
    %199 = vmatpush.msra.mxu0 0.0
    %200 = vmatpush.msra.mxu0 0.0
    %201 = vmatpush.msra.mxu0 0.0
    %202 = vmatpush.msra.mxu0 0.0
    %203 = vmatpush.msra.mxu0 0.0
    %204 = vmatpush.msra.mxu0 0.0
    %205 = vmatpush.msra.mxu0 0.0
    %206 = vmatpush.msra.mxu0 0.0
    %207 = vmatpush.msra.mxu0 0.0
    %208 = vmatpush.msra.mxu0 0.0
    %209 = vmatpush.msra.mxu0 0.0
    %210 = vmatpush.msra.mxu0 0.0
    %211 = vmatpush.msra.mxu0 %v127
    %212 = vmatpush.msra.mxu0 %v125
    %213 = vmatpush.msra.mxu0 %v123
    %214 = vmatpush.msra.mxu0 %v121
    %215 = vmatmul.f32.gmra.mxu0 %v197
    %v216 = vpop.f32.mrf.mxu0
    %v217 = vadd.f32 0.0, %v216
    %218 = vdwg.mxu0
    %v219 = vadd.f32 %v95, %v217
    %v220 = vxor.u32 %v219, 2147483648
    %v221 = vmul.f32 %v220, 1.442695
    %v222 = vpow.pop %v221
    %v223 = vadd.f32 %v222, 1.0
    %v224 = vrcp.pop %v223
    %v225 = vmul.f32 %v223, %v224
    %v226 = vsub.f32 1.0, %v225
    %v227 = vmul.f32 %v224, %v226
    %v228 = vadd.f32 %v224, %v227
    %vm229 = vweird.f32 %v223
    %vm230 = vweird.f32 %v224
    %vm231 = vmor %vm229, %vm230
    %v232 = vsel %vm231, %v224, %v228
    %v233 = vand.u32 2147483647, %v223
    %vm234 = vcmp.eq.f32.partialorder %v233, 8.507059e+37
    %v235 = vand.u32 %v223, 2147483648
    %v236 = vor.u32 1.1754944e-38, %v235
    %v237 = vsel %vm234, %v236, %v232
    %v238 = vmul.f32 1.0, %v237
    %v239 = vtanh.pop %v219
    %v240 = vmul.f32 %v238, %v187
    %242 = vrot.lane.b32.xlu0 %v239, 64
    %v243 = vpop.permute.xlu0 %242
    %v245 = vmul.f32 %v238, %v243
    %247 = vrot.lane.b32.xlu0 %v245, 32
    %v248 = vpop.permute.xlu0 %247
    %v250 = vadd.f32 %v240, %v248
    %v251 = vtanh.pop %v250
    %253 = vrot.lane.b32.xlu0 %v251, 64
    %v254 = vpop.permute.xlu0 %253
    %v256 = vmul.f32 %v238, %v254
    %258 = vrot.lane.b32.xlu0 %v256, 32
    %v259 = vpop.permute.xlu0 %258
    %v260 = vsel %vm132, %v259, 0
    %262 = vmatpush.msra.mxu0 0.0
    %263 = vmatpush.msra.mxu0 0.0
    %264 = vmatpush.msra.mxu0 0.0
    %265 = vmatpush.msra.mxu0 0.0
    %266 = vmatpush.msra.mxu0 0.0
    %267 = vmatpush.msra.mxu0 0.0
    %268 = vmatpush.msra.mxu0 0.0
    %269 = vmatpush.msra.mxu0 0.0
    %270 = vmatpush.msra.mxu0 0.0
    %271 = vmatpush.msra.mxu0 0.0
    %272 = vmatpush.msra.mxu0 0.0
    %273 = vmatpush.msra.mxu0 0.0
    %274 = vmatpush.msra.mxu0 %v127
    %275 = vmatpush.msra.mxu0 %v125
    %276 = vmatpush.msra.mxu0 %v123
    %277 = vmatpush.msra.mxu0 %v121
    %278 = vmatmul.f32.gmra.mxu0 %v260
    %v279 = vpop.f32.mrf.mxu0
    %v280 = vadd.f32 0.0, %v279
    %281 = vdwg.mxu0
    %v282 = vadd.f32 %v98, %v280
    %v283 = vxor.u32 %v282, 2147483648
    %v284 = vmul.f32 %v283, 1.442695
    %v285 = vpow.pop %v284
    %v286 = vadd.f32 %v285, 1.0
    %v287 = vrcp.pop %v286
    %v288 = vmul.f32 %v286, %v287
    %v289 = vsub.f32 1.0, %v288
    %v290 = vmul.f32 %v287, %v289
    %v291 = vadd.f32 %v287, %v290
    %vm292 = vweird.f32 %v286
    %vm293 = vweird.f32 %v287
    %vm294 = vmor %vm292, %vm293
    %v295 = vsel %vm294, %v287, %v291
    %v296 = vand.u32 2147483647, %v286
    %vm297 = vcmp.eq.f32.partialorder %v296, 8.507059e+37
    %v298 = vand.u32 %v286, 2147483648
    %v299 = vor.u32 1.1754944e-38, %v298
    %v300 = vsel %vm297, %v299, %v295
    %v301 = vmul.f32 1.0, %v300
    %v302 = vtanh.pop %v282
    %v303 = vmul.f32 %v301, %v250
    %305 = vrot.lane.b32.xlu0 %v302, 64
    %v306 = vpop.permute.xlu0 %305
    %v308 = vmul.f32 %v301, %v306
    %310 = vrot.lane.b32.xlu0 %v308, 32
    %v311 = vpop.permute.xlu0 %310
    %v313 = vadd.f32 %v303, %v311
    %v314 = vtanh.pop %v313
    %316 = vrot.lane.b32.xlu0 %v314, 64
    %v317 = vpop.permute.xlu0 %316
    %v319 = vmul.f32 %v301, %v317
    %321 = vrot.lane.b32.xlu0 %v319, 32
    %v322 = vpop.permute.xlu0 %321
    %v323 = vsel %vm132, %v322, 0
    %325 = vmatpush.msra.mxu0 0.0
    %326 = vmatpush.msra.mxu0 0.0
    %327 = vmatpush.msra.mxu0 0.0
    %328 = vmatpush.msra.mxu0 0.0
    %329 = vmatpush.msra.mxu0 0.0
    %330 = vmatpush.msra.mxu0 0.0
    %331 = vmatpush.msra.mxu0 0.0
    %332 = vmatpush.msra.mxu0 0.0
    %333 = vmatpush.msra.mxu0 0.0
    %334 = vmatpush.msra.mxu0 0.0
    %335 = vmatpush.msra.mxu0 0.0
    %336 = vmatpush.msra.mxu0 0.0
    %337 = vmatpush.msra.mxu0 %v127
    %338 = vmatpush.msra.mxu0 %v125
    %339 = vmatpush.msra.mxu0 %v123
    %340 = vmatpush.msra.mxu0 %v121
    %341 = vmatmul.f32.gmra.mxu0 %v323
    %v342 = vpop.f32.mrf.mxu0
    %v343 = vadd.f32 0.0, %v342
    %344 = vdwg.mxu0
    %v345 = vadd.f32 %v101, %v343
    %v346 = vxor.u32 %v345, 2147483648
    %v347 = vmul.f32 %v346, 1.442695
    %v348 = vpow.pop %v347
    %v349 = vadd.f32 %v348, 1.0
    %v350 = vrcp.pop %v349
    %v351 = vmul.f32 %v349, %v350
    %v352 = vsub.f32 1.0, %v351
    %v353 = vmul.f32 %v350, %v352
    %v354 = vadd.f32 %v350, %v353
    %vm355 = vweird.f32 %v349
    %vm356 = vweird.f32 %v350
    %vm357 = vmor %vm355, %vm356
    %v358 = vsel %vm357, %v350, %v354
    %v359 = vand.u32 2147483647, %v349
    %vm360 = vcmp.eq.f32.partialorder %v359, 8.507059e+37
    %v361 = vand.u32 %v349, 2147483648
    %v362 = vor.u32 1.1754944e-38, %v361
    %v363 = vsel %vm360, %v362, %v358
    %v364 = vmul.f32 1.0, %v363
    %v365 = vtanh.pop %v345
    %v366 = vmul.f32 %v364, %v313
    %368 = vrot.lane.b32.xlu0 %v365, 64
    %v369 = vpop.permute.xlu0 %368
    %v371 = vmul.f32 %v364, %v369
    %373 = vrot.lane.b32.xlu0 %v371, 32
    %v374 = vpop.permute.xlu0 %373
    %v376 = vadd.f32 %v366, %v374
    %v377 = vtanh.pop %v376
    %379 = vrot.lane.b32.xlu0 %v377, 64
    %v380 = vpop.permute.xlu0 %379
    %v382 = vmul.f32 %v364, %v380
    %384 = vrot.lane.b32.xlu0 %v382, 32
    %v385 = vpop.permute.xlu0 %384
    %v386 = vsel %vm132, %v385, 0
    %388 = vmatpush.msra.mxu0 0.0
    %389 = vmatpush.msra.mxu0 0.0
    %390 = vmatpush.msra.mxu0 0.0
    %391 = vmatpush.msra.mxu0 0.0
    %392 = vmatpush.msra.mxu0 0.0
    %393 = vmatpush.msra.mxu0 0.0
    %394 = vmatpush.msra.mxu0 0.0
    %395 = vmatpush.msra.mxu0 0.0
    %396 = vmatpush.msra.mxu0 0.0
    %397 = vmatpush.msra.mxu0 0.0
    %398 = vmatpush.msra.mxu0 0.0
    %399 = vmatpush.msra.mxu0 0.0
    %400 = vmatpush.msra.mxu0 %v127
    %401 = vmatpush.msra.mxu0 %v125
    %402 = vmatpush.msra.mxu0 %v123
    %403 = vmatpush.msra.mxu0 %v121
    %404 = vmatmul.f32.gmra.mxu0 %v386
    %v405 = vpop.f32.mrf.mxu0
    %v406 = vadd.f32 0.0, %v405
    %407 = vdwg.mxu0
    %v408 = vadd.f32 %v104, %v406
    %v409 = vxor.u32 %v408, 2147483648
    %v410 = vmul.f32 %v409, 1.442695
    %v411 = vpow.pop %v410
    %v412 = vadd.f32 %v411, 1.0
    %v413 = vrcp.pop %v412
    %v414 = vmul.f32 %v412, %v413
    %v415 = vsub.f32 1.0, %v414
    %v416 = vmul.f32 %v413, %v415
    %v417 = vadd.f32 %v413, %v416
    %vm418 = vweird.f32 %v412
    %vm419 = vweird.f32 %v413
    %vm420 = vmor %vm418, %vm419
    %v421 = vsel %vm420, %v413, %v417
    %v422 = vand.u32 2147483647, %v412
    %vm423 = vcmp.eq.f32.partialorder %v422, 8.507059e+37
    %v424 = vand.u32 %v412, 2147483648
    %v425 = vor.u32 1.1754944e-38, %v424
    %v426 = vsel %vm423, %v425, %v421
    %v427 = vmul.f32 1.0, %v426
    %v428 = vtanh.pop %v408
    %v429 = vmul.f32 %v427, %v376
    %431 = vrot.lane.b32.xlu0 %v428, 64
    %v432 = vpop.permute.xlu0 %431
    %v434 = vmul.f32 %v427, %v432
    %436 = vrot.lane.b32.xlu0 %v434, 32
    %v437 = vpop.permute.xlu0 %436
    %v439 = vadd.f32 %v429, %v437
    %v440 = vtanh.pop %v439
    %442 = vrot.lane.b32.xlu0 %v440, 64
    %v443 = vpop.permute.xlu0 %442
    %v445 = vmul.f32 %v427, %v443
    %447 = vrot.lane.b32.xlu0 %v445, 32
    %v448 = vpop.permute.xlu0 %447
    %v449 = vsel %vm132, %v448, 0
    %451 = vmatpush.msra.mxu0 0.0
    %452 = vmatpush.msra.mxu0 0.0
    %453 = vmatpush.msra.mxu0 0.0
    %454 = vmatpush.msra.mxu0 0.0
    %455 = vmatpush.msra.mxu0 0.0
    %456 = vmatpush.msra.mxu0 0.0
    %457 = vmatpush.msra.mxu0 0.0
    %458 = vmatpush.msra.mxu0 0.0
    %459 = vmatpush.msra.mxu0 0.0
    %460 = vmatpush.msra.mxu0 0.0
    %461 = vmatpush.msra.mxu0 0.0
    %462 = vmatpush.msra.mxu0 0.0
    %463 = vmatpush.msra.mxu0 %v127
    %464 = vmatpush.msra.mxu0 %v125
    %465 = vmatpush.msra.mxu0 %v123
    %466 = vmatpush.msra.mxu0 %v121
    %467 = vmatmul.f32.gmra.mxu0 %v449
    %v468 = vpop.f32.mrf.mxu0
    %v469 = vadd.f32 0.0, %v468
    %470 = vdwg.mxu0
    %v471 = vadd.f32 %v107, %v469
    %v472 = vxor.u32 %v471, 2147483648
    %v473 = vmul.f32 %v472, 1.442695
    %v474 = vpow.pop %v473
    %v475 = vadd.f32 %v474, 1.0
    %v476 = vrcp.pop %v475
    %v477 = vmul.f32 %v475, %v476
    %v478 = vsub.f32 1.0, %v477
    %v479 = vmul.f32 %v476, %v478
    %v480 = vadd.f32 %v476, %v479
    %vm481 = vweird.f32 %v475
    %vm482 = vweird.f32 %v476
    %vm483 = vmor %vm481, %vm482
    %v484 = vsel %vm483, %v476, %v480
    %v485 = vand.u32 2147483647, %v475
    %vm486 = vcmp.eq.f32.partialorder %v485, 8.507059e+37
    %v487 = vand.u32 %v475, 2147483648
    %v488 = vor.u32 1.1754944e-38, %v487
    %v489 = vsel %vm486, %v488, %v484
    %v490 = vmul.f32 1.0, %v489
    %v491 = vtanh.pop %v471
    %v492 = vmul.f32 %v490, %v439
    %494 = vrot.lane.b32.xlu0 %v491, 64
    %v495 = vpop.permute.xlu0 %494
    %v497 = vmul.f32 %v490, %v495
    %499 = vrot.lane.b32.xlu0 %v497, 32
    %v500 = vpop.permute.xlu0 %499
    %v502 = vadd.f32 %v492, %v500
    %v503 = vtanh.pop %v502
    %505 = vrot.lane.b32.xlu0 %v503, 64
    %v506 = vpop.permute.xlu0 %505
    %v508 = vmul.f32 %v490, %v506
    %510 = vrot.lane.b32.xlu0 %v508, 32
    %v511 = vpop.permute.xlu0 %510
    %v512 = vsel %vm132, %v511, 0
    %514 = vmatpush.msra.mxu0 0.0
    %515 = vmatpush.msra.mxu0 0.0
    %516 = vmatpush.msra.mxu0 0.0
    %517 = vmatpush.msra.mxu0 0.0
    %518 = vmatpush.msra.mxu0 0.0
    %519 = vmatpush.msra.mxu0 0.0
    %520 = vmatpush.msra.mxu0 0.0
    %521 = vmatpush.msra.mxu0 0.0
    %522 = vmatpush.msra.mxu0 0.0
    %523 = vmatpush.msra.mxu0 0.0
    %524 = vmatpush.msra.mxu0 0.0
    %525 = vmatpush.msra.mxu0 0.0
    %526 = vmatpush.msra.mxu0 %v127
    %527 = vmatpush.msra.mxu0 %v125
    %528 = vmatpush.msra.mxu0 %v123
    %529 = vmatpush.msra.mxu0 %v121
    %530 = vmatmul.f32.gmra.mxu0 %v512
    %v531 = vpop.f32.mrf.mxu0
    %v532 = vadd.f32 0.0, %v531
    %533 = vdwg.mxu0
    %v534 = vadd.f32 %v110, %v532
    %v535 = vxor.u32 %v534, 2147483648
    %v536 = vmul.f32 %v535, 1.442695
    %v537 = vpow.pop %v536
    %v538 = vadd.f32 %v537, 1.0
    %v539 = vrcp.pop %v538
    %v540 = vmul.f32 %v538, %v539
    %v541 = vsub.f32 1.0, %v540
    %v542 = vmul.f32 %v539, %v541
    %v543 = vadd.f32 %v539, %v542
    %vm544 = vweird.f32 %v538
    %vm545 = vweird.f32 %v539
    %vm546 = vmor %vm544, %vm545
    %v547 = vsel %vm546, %v539, %v543
    %v548 = vand.u32 2147483647, %v538
    %vm549 = vcmp.eq.f32.partialorder %v548, 8.507059e+37
    %v550 = vand.u32 %v538, 2147483648
    %v551 = vor.u32 1.1754944e-38, %v550
    %v552 = vsel %vm549, %v551, %v547
    %v553 = vmul.f32 1.0, %v552
    %v554 = vtanh.pop %v534
    %v555 = vmul.f32 %v553, %v502
    %557 = vrot.lane.b32.xlu0 %v554, 64
    %v558 = vpop.permute.xlu0 %557
    %v560 = vmul.f32 %v553, %v558
    %562 = vrot.lane.b32.xlu0 %v560, 32
    %v563 = vpop.permute.xlu0 %562
    %v565 = vadd.f32 %v555, %v563
    %v566 = vtanh.pop %v565
    %568 = vrot.lane.b32.xlu0 %v566, 64
    %v569 = vpop.permute.xlu0 %568
    %v571 = vmul.f32 %v553, %v569
    %573 = vrot.lane.b32.xlu0 %v571, 32
    %v574 = vpop.permute.xlu0 %573
    %v575 = vsel %vm132, %v574, 0
    %577 = vmatpush.msra.mxu0 0.0
    %578 = vmatpush.msra.mxu0 0.0
    %579 = vmatpush.msra.mxu0 0.0
    %580 = vmatpush.msra.mxu0 0.0
    %581 = vmatpush.msra.mxu0 0.0
    %582 = vmatpush.msra.mxu0 0.0
    %583 = vmatpush.msra.mxu0 0.0
    %584 = vmatpush.msra.mxu0 0.0
    %585 = vmatpush.msra.mxu0 0.0
    %586 = vmatpush.msra.mxu0 0.0
    %587 = vmatpush.msra.mxu0 0.0
    %588 = vmatpush.msra.mxu0 0.0
    %589 = vmatpush.msra.mxu0 %v127
    %590 = vmatpush.msra.mxu0 %v125
    %591 = vmatpush.msra.mxu0 %v123
    %592 = vmatpush.msra.mxu0 %v121
    %593 = vmatmul.f32.gmra.mxu0 %v575
    %v594 = vpop.f32.mrf.mxu0
    %v595 = vadd.f32 0.0, %v594
    %596 = vdwg.mxu0
    %v597 = vadd.f32 %v113, %v595
    %v598 = vxor.u32 %v597, 2147483648
    %v599 = vmul.f32 %v598, 1.442695
    %v600 = vpow.pop %v599
    %v601 = vadd.f32 %v600, 1.0
    %v602 = vrcp.pop %v601
    %v603 = vmul.f32 %v601, %v602
    %v604 = vsub.f32 1.0, %v603
    %v605 = vmul.f32 %v602, %v604
    %v606 = vadd.f32 %v602, %v605
    %vm607 = vweird.f32 %v601
    %vm608 = vweird.f32 %v602
    %vm609 = vmor %vm607, %vm608
    %v610 = vsel %vm609, %v602, %v606
    %v611 = vand.u32 2147483647, %v601
    %vm612 = vcmp.eq.f32.partialorder %v611, 8.507059e+37
    %v613 = vand.u32 %v601, 2147483648
    %v614 = vor.u32 1.1754944e-38, %v613
    %v615 = vsel %vm612, %v614, %v610
    %v616 = vmul.f32 1.0, %v615
    %v617 = vtanh.pop %v597
    %v618 = vmul.f32 %v616, %v565
    %620 = vrot.lane.b32.xlu0 %v617, 64
    %v621 = vpop.permute.xlu0 %620
    %v623 = vmul.f32 %v616, %v621
    %625 = vrot.lane.b32.xlu0 %v623, 32
    %v626 = vpop.permute.xlu0 %625
    %v628 = vadd.f32 %v618, %v626
    %v629 = vtanh.pop %v628
    %631 = vrot.lane.b32.xlu0 %v629, 64
    %v632 = vpop.permute.xlu0 %631
    %v634 = vmul.f32 %v616, %v632
    %s635 = scalar_lea.vmem [#allocation2], 64
    %v636 = vld [vmem:[%s635] sm:$0xff]
    %v637 = vld [vmem:[%s635 + $0x8] sm:$0xff]
    %v638 = vld [vmem:[%s635 + $0x10] sm:$0xff]
    %v639 = vld [vmem:[%s635 + $0x18] sm:$0xff]
    %v640 = vld [vmem:[%s635 + $0x20] sm:$0xff]
    %v641 = vld [vmem:[%s635 + $0x28] sm:$0xff]
    %v642 = vld [vmem:[%s635 + $0x30] sm:$0xff]
    %v643 = vld [vmem:[%s635 + $0x38] sm:$0xff]
    %v644 = vld [vmem:[%s2 + $0x1] sm:$0x1]
    %v645 = vperm.slane %v644, 0
    %647 = vrot.lane.b32.xlu0 %v634, 32
    %v648 = vpop.permute.xlu0 %647
    %v649 = vsel %vm132, %v648, 0
    %651 = vmatpush.msra.mxu0 0.0
    %652 = vmatpush.msra.mxu0 0.0
    %653 = vmatpush.msra.mxu0 0.0
    %654 = vmatpush.msra.mxu0 0.0
    %655 = vmatpush.msra.mxu0 0.0
    %656 = vmatpush.msra.mxu0 0.0
    %657 = vmatpush.msra.mxu0 0.0
    %658 = vmatpush.msra.mxu0 0.0
    %659 = vmatpush.msra.mxu0 0.0
    %660 = vmatpush.msra.mxu0 0.0
    %661 = vmatpush.msra.mxu0 0.0
    %662 = vmatpush.msra.mxu0 0.0
    %663 = vmatpush.msra.mxu0 %v639
    %664 = vmatpush.msra.mxu0 %v638
    %665 = vmatpush.msra.mxu0 %v637
    %666 = vmatpush.msra.mxu0 %v636
    %667 = vmatmul.f32.gmra.mxu0 %v197
    %v668 = vpop.f32.mrf.mxu0
    %v669 = vadd.f32 %v645, %v668
    %670 = vmatmul.f32.gmra.mxu0 %v260
    %v671 = vpop.f32.mrf.mxu0
    %v672 = vadd.f32 %v645, %v671
    %673 = vmatmul.f32.gmra.mxu0 %v323
    %v674 = vpop.f32.mrf.mxu0
    %v675 = vadd.f32 %v645, %v674
    %676 = vmatmul.f32.gmra.mxu0 %v386
    %v677 = vpop.f32.mrf.mxu0
    %v678 = vadd.f32 %v645, %v677
    %679 = vmatmul.f32.gmra.mxu0 %v449
    %v680 = vpop.f32.mrf.mxu0
    %v681 = vadd.f32 %v645, %v680
    %682 = vmatmul.f32.gmra.mxu0 %v512
    %v683 = vpop.f32.mrf.mxu0
    %v684 = vadd.f32 %v645, %v683
    %685 = vmatmul.f32.gmra.mxu0 %v575
    %v686 = vpop.f32.mrf.mxu0
    %v687 = vadd.f32 %v645, %v686
    %688 = vmatmul.f32.gmra.mxu0 %v649
    %v689 = vpop.f32.mrf.mxu0
    %v690 = vadd.f32 %v645, %v689
    %691 = vdwg.mxu0
    %692 = vmatpush.msra.mxu0 0.0
    %693 = vmatpush.msra.mxu0 0.0
    %694 = vmatpush.msra.mxu0 0.0
    %695 = vmatpush.msra.mxu0 0.0
    %696 = vmatpush.msra.mxu0 0.0
    %697 = vmatpush.msra.mxu0 0.0
    %698 = vmatpush.msra.mxu0 0.0
    %699 = vmatpush.msra.mxu0 0.0
    %700 = vmatpush.msra.mxu0 0.0
    %701 = vmatpush.msra.mxu0 0.0
    %702 = vmatpush.msra.mxu0 0.0
    %703 = vmatpush.msra.mxu0 0.0
    %704 = vmatpush.msra.mxu0 %v643
    %705 = vmatpush.msra.mxu0 %v642
    %706 = vmatpush.msra.mxu0 %v641
    %707 = vmatpush.msra.mxu0 %v640
    %708 = vmatmul.f32.gmra.mxu0 %v134
    %v709 = vpop.f32.mrf.mxu0
    %v710 = vadd.f32 0.0, %v709
    %711 = vdwg.mxu0
    %v712 = vadd.f32 %v669, %v710
    %v713 = vxor.u32 %v712, 2147483648
    %v714 = vmul.f32 %v713, 1.442695
    %v715 = vpow.pop %v714
    %v716 = vadd.f32 %v715, 1.0
    %v717 = vrcp.pop %v716
    %v718 = vmul.f32 %v716, %v717
    %v719 = vsub.f32 1.0, %v718
    %v720 = vmul.f32 %v717, %v719
    %v721 = vadd.f32 %v717, %v720
    %vm722 = vweird.f32 %v716
    %vm723 = vweird.f32 %v717
    %vm724 = vmor %vm722, %vm723
    %v725 = vsel %vm724, %v717, %v721
    %v726 = vand.u32 2147483647, %v716
    %vm727 = vcmp.eq.f32.partialorder %v726, 8.507059e+37
    %v728 = vand.u32 %v716, 2147483648
    %v729 = vor.u32 1.1754944e-38, %v728
    %v730 = vsel %vm727, %v729, %v725
    %v731 = vmul.f32 1.0, %v730
    %v732 = vtanh.pop %v712
    %v733 = vmul.f32 %v731, 0.0
    %735 = vrot.lane.b32.xlu0 %v732, 64
    %v736 = vpop.permute.xlu0 %735
    %v738 = vmul.f32 %v731, %v736
    %740 = vrot.lane.b32.xlu0 %v738, 32
    %v741 = vpop.permute.xlu0 %740
    %v743 = vadd.f32 %v733, %v741
    %v744 = vtanh.pop %v743
    %746 = vrot.lane.b32.xlu0 %v744, 64
    %v747 = vpop.permute.xlu0 %746
    %v749 = vmul.f32 %v731, %v747
    %751 = vrot.lane.b32.xlu0 %v749, 32
    %v752 = vpop.permute.xlu0 %751
    %v753 = vsel %vm132, %v752, 0
    %755 = vmatpush.msra.mxu0 0.0
    %756 = vmatpush.msra.mxu0 0.0
    %757 = vmatpush.msra.mxu0 0.0
    %758 = vmatpush.msra.mxu0 0.0
    %759 = vmatpush.msra.mxu0 0.0
    %760 = vmatpush.msra.mxu0 0.0
    %761 = vmatpush.msra.mxu0 0.0
    %762 = vmatpush.msra.mxu0 0.0
    %763 = vmatpush.msra.mxu0 0.0
    %764 = vmatpush.msra.mxu0 0.0
    %765 = vmatpush.msra.mxu0 0.0
    %766 = vmatpush.msra.mxu0 0.0
    %767 = vmatpush.msra.mxu0 %v643
    %768 = vmatpush.msra.mxu0 %v642
    %769 = vmatpush.msra.mxu0 %v641
    %770 = vmatpush.msra.mxu0 %v640
    %771 = vmatmul.f32.gmra.mxu0 %v753
    %v772 = vpop.f32.mrf.mxu0
    %v773 = vadd.f32 0.0, %v772
    %774 = vdwg.mxu0
    %v775 = vadd.f32 %v672, %v773
    %v776 = vxor.u32 %v775, 2147483648
    %v777 = vmul.f32 %v776, 1.442695
    %v778 = vpow.pop %v777
    %v779 = vadd.f32 %v778, 1.0
    %v780 = vrcp.pop %v779
    %v781 = vmul.f32 %v779, %v780
    %v782 = vsub.f32 1.0, %v781
    %v783 = vmul.f32 %v780, %v782
    %v784 = vadd.f32 %v780, %v783
    %vm785 = vweird.f32 %v779
    %vm786 = vweird.f32 %v780
    %vm787 = vmor %vm785, %vm786
    %v788 = vsel %vm787, %v780, %v784
    %v789 = vand.u32 2147483647, %v779
    %vm790 = vcmp.eq.f32.partialorder %v789, 8.507059e+37
    %v791 = vand.u32 %v779, 2147483648
    %v792 = vor.u32 1.1754944e-38, %v791
    %v793 = vsel %vm790, %v792, %v788
    %v794 = vmul.f32 1.0, %v793
    %v795 = vtanh.pop %v775
    %v796 = vmul.f32 %v794, %v743
    %798 = vrot.lane.b32.xlu0 %v795, 64
    %v799 = vpop.permute.xlu0 %798
    %v801 = vmul.f32 %v794, %v799
    %803 = vrot.lane.b32.xlu0 %v801, 32
    %v804 = vpop.permute.xlu0 %803
    %v806 = vadd.f32 %v796, %v804
    %v807 = vtanh.pop %v806
    %809 = vrot.lane.b32.xlu0 %v807, 64
    %v810 = vpop.permute.xlu0 %809
    %v812 = vmul.f32 %v794, %v810
    %814 = vrot.lane.b32.xlu0 %v812, 32
    %v815 = vpop.permute.xlu0 %814
    %v816 = vsel %vm132, %v815, 0
    %818 = vmatpush.msra.mxu0 0.0
    %819 = vmatpush.msra.mxu0 0.0
    %820 = vmatpush.msra.mxu0 0.0
    %821 = vmatpush.msra.mxu0 0.0
    %822 = vmatpush.msra.mxu0 0.0
    %823 = vmatpush.msra.mxu0 0.0
    %824 = vmatpush.msra.mxu0 0.0
    %825 = vmatpush.msra.mxu0 0.0
    %826 = vmatpush.msra.mxu0 0.0
    %827 = vmatpush.msra.mxu0 0.0
    %828 = vmatpush.msra.mxu0 0.0
    %829 = vmatpush.msra.mxu0 0.0
    %830 = vmatpush.msra.mxu0 %v643
    %831 = vmatpush.msra.mxu0 %v642
    %832 = vmatpush.msra.mxu0 %v641
    %833 = vmatpush.msra.mxu0 %v640
    %834 = vmatmul.f32.gmra.mxu0 %v816
    %v835 = vpop.f32.mrf.mxu0
    %v836 = vadd.f32 0.0, %v835
    %837 = vdwg.mxu0
    %v838 = vadd.f32 %v675, %v836
    %v839 = vxor.u32 %v838, 2147483648
    %v840 = vmul.f32 %v839, 1.442695
    %v841 = vpow.pop %v840
    %v842 = vadd.f32 %v841, 1.0
    %v843 = vrcp.pop %v842
    %v844 = vmul.f32 %v842, %v843
    %v845 = vsub.f32 1.0, %v844
    %v846 = vmul.f32 %v843, %v845
    %v847 = vadd.f32 %v843, %v846
    %vm848 = vweird.f32 %v842
    %vm849 = vweird.f32 %v843
    %vm850 = vmor %vm848, %vm849
    %v851 = vsel %vm850, %v843, %v847
    %v852 = vand.u32 2147483647, %v842
    %vm853 = vcmp.eq.f32.partialorder %v852, 8.507059e+37
    %v854 = vand.u32 %v842, 2147483648
    %v855 = vor.u32 1.1754944e-38, %v854
    %v856 = vsel %vm853, %v855, %v851
    %v857 = vmul.f32 1.0, %v856
    %v858 = vtanh.pop %v838
    %v859 = vmul.f32 %v857, %v806
    %861 = vrot.lane.b32.xlu0 %v858, 64
    %v862 = vpop.permute.xlu0 %861
    %v864 = vmul.f32 %v857, %v862
    %866 = vrot.lane.b32.xlu0 %v864, 32
    %v867 = vpop.permute.xlu0 %866
    %v869 = vadd.f32 %v859, %v867
    %v870 = vtanh.pop %v869
    %872 = vrot.lane.b32.xlu0 %v870, 64
    %v873 = vpop.permute.xlu0 %872
    %v875 = vmul.f32 %v857, %v873
    %877 = vrot.lane.b32.xlu0 %v875, 32
    %v878 = vpop.permute.xlu0 %877
    %v879 = vsel %vm132, %v878, 0
    %881 = vmatpush.msra.mxu0 0.0
    %882 = vmatpush.msra.mxu0 0.0
    %883 = vmatpush.msra.mxu0 0.0
    %884 = vmatpush.msra.mxu0 0.0
    %885 = vmatpush.msra.mxu0 0.0
    %886 = vmatpush.msra.mxu0 0.0
    %887 = vmatpush.msra.mxu0 0.0
    %888 = vmatpush.msra.mxu0 0.0
    %889 = vmatpush.msra.mxu0 0.0
    %890 = vmatpush.msra.mxu0 0.0
    %891 = vmatpush.msra.mxu0 0.0
    %892 = vmatpush.msra.mxu0 0.0
    %893 = vmatpush.msra.mxu0 %v643
    %894 = vmatpush.msra.mxu0 %v642
    %895 = vmatpush.msra.mxu0 %v641
    %896 = vmatpush.msra.mxu0 %v640
    %897 = vmatmul.f32.gmra.mxu0 %v879
    %v898 = vpop.f32.mrf.mxu0
    %v899 = vadd.f32 0.0, %v898
    %900 = vdwg.mxu0
    %v901 = vadd.f32 %v678, %v899
    %v902 = vxor.u32 %v901, 2147483648
    %v903 = vmul.f32 %v902, 1.442695
    %v904 = vpow.pop %v903
    %v905 = vadd.f32 %v904, 1.0
    %v906 = vrcp.pop %v905
    %v907 = vmul.f32 %v905, %v906
    %v908 = vsub.f32 1.0, %v907
    %v909 = vmul.f32 %v906, %v908
    %v910 = vadd.f32 %v906, %v909
    %vm911 = vweird.f32 %v905
    %vm912 = vweird.f32 %v906
    %vm913 = vmor %vm911, %vm912
    %v914 = vsel %vm913, %v906, %v910
    %v915 = vand.u32 2147483647, %v905
    %vm916 = vcmp.eq.f32.partialorder %v915, 8.507059e+37
    %v917 = vand.u32 %v905, 2147483648
    %v918 = vor.u32 1.1754944e-38, %v917
    %v919 = vsel %vm916, %v918, %v914
    %v920 = vmul.f32 1.0, %v919
    %v921 = vtanh.pop %v901
    %v922 = vmul.f32 %v920, %v869
    %924 = vrot.lane.b32.xlu0 %v921, 64
    %v925 = vpop.permute.xlu0 %924
    %v927 = vmul.f32 %v920, %v925
    %929 = vrot.lane.b32.xlu0 %v927, 32
    %v930 = vpop.permute.xlu0 %929
    %v932 = vadd.f32 %v922, %v930
    %v933 = vtanh.pop %v932
    %935 = vrot.lane.b32.xlu0 %v933, 64
    %v936 = vpop.permute.xlu0 %935
    %v938 = vmul.f32 %v920, %v936
    %940 = vrot.lane.b32.xlu0 %v938, 32
    %v941 = vpop.permute.xlu0 %940
    %v942 = vsel %vm132, %v941, 0
    %944 = vmatpush.msra.mxu0 0.0
    %945 = vmatpush.msra.mxu0 0.0
    %946 = vmatpush.msra.mxu0 0.0
    %947 = vmatpush.msra.mxu0 0.0
    %948 = vmatpush.msra.mxu0 0.0
    %949 = vmatpush.msra.mxu0 0.0
    %950 = vmatpush.msra.mxu0 0.0
    %951 = vmatpush.msra.mxu0 0.0
    %952 = vmatpush.msra.mxu0 0.0
    %953 = vmatpush.msra.mxu0 0.0
    %954 = vmatpush.msra.mxu0 0.0
    %955 = vmatpush.msra.mxu0 0.0
    %956 = vmatpush.msra.mxu0 %v643
    %957 = vmatpush.msra.mxu0 %v642
    %958 = vmatpush.msra.mxu0 %v641
    %959 = vmatpush.msra.mxu0 %v640
    %960 = vmatmul.f32.gmra.mxu0 %v942
    %v961 = vpop.f32.mrf.mxu0
    %v962 = vadd.f32 0.0, %v961
    %963 = vdwg.mxu0
    %v964 = vadd.f32 %v681, %v962
    %v965 = vxor.u32 %v964, 2147483648
    %v966 = vmul.f32 %v965, 1.442695
    %v967 = vpow.pop %v966
    %v968 = vadd.f32 %v967, 1.0
    %v969 = vrcp.pop %v968
    %v970 = vmul.f32 %v968, %v969
    %v971 = vsub.f32 1.0, %v970
    %v972 = vmul.f32 %v969, %v971
    %v973 = vadd.f32 %v969, %v972
    %vm974 = vweird.f32 %v968
    %vm975 = vweird.f32 %v969
    %vm976 = vmor %vm974, %vm975
    %v977 = vsel %vm976, %v969, %v973
    %v978 = vand.u32 2147483647, %v968
    %vm979 = vcmp.eq.f32.partialorder %v978, 8.507059e+37
    %v980 = vand.u32 %v968, 2147483648
    %v981 = vor.u32 1.1754944e-38, %v980
    %v982 = vsel %vm979, %v981, %v977
    %v983 = vmul.f32 1.0, %v982
    %v984 = vtanh.pop %v964
    %v985 = vmul.f32 %v983, %v932
    %987 = vrot.lane.b32.xlu0 %v984, 64
    %v988 = vpop.permute.xlu0 %987
    %v990 = vmul.f32 %v983, %v988
    %992 = vrot.lane.b32.xlu0 %v990, 32
    %v993 = vpop.permute.xlu0 %992
    %v995 = vadd.f32 %v985, %v993
    %v996 = vtanh.pop %v995
    %998 = vrot.lane.b32.xlu0 %v996, 64
    %v999 = vpop.permute.xlu0 %998
    %v1001 = vmul.f32 %v983, %v999
    %1003 = vrot.lane.b32.xlu0 %v1001, 32
    %v1004 = vpop.permute.xlu0 %1003
    %v1005 = vsel %vm132, %v1004, 0
    %1007 = vmatpush.msra.mxu0 0.0
    %1008 = vmatpush.msra.mxu0 0.0
    %1009 = vmatpush.msra.mxu0 0.0
    %1010 = vmatpush.msra.mxu0 0.0
    %1011 = vmatpush.msra.mxu0 0.0
    %1012 = vmatpush.msra.mxu0 0.0
    %1013 = vmatpush.msra.mxu0 0.0
    %1014 = vmatpush.msra.mxu0 0.0
    %1015 = vmatpush.msra.mxu0 0.0
    %1016 = vmatpush.msra.mxu0 0.0
    %1017 = vmatpush.msra.mxu0 0.0
    %1018 = vmatpush.msra.mxu0 0.0
    %1019 = vmatpush.msra.mxu0 %v643
    %1020 = vmatpush.msra.mxu0 %v642
    %1021 = vmatpush.msra.mxu0 %v641
    %1022 = vmatpush.msra.mxu0 %v640
    %1023 = vmatmul.f32.gmra.mxu0 %v1005
    %v1024 = vpop.f32.mrf.mxu0
    %v1025 = vadd.f32 0.0, %v1024
    %1026 = vdwg.mxu0
    %v1027 = vadd.f32 %v684, %v1025
    %v1028 = vxor.u32 %v1027, 2147483648
    %v1029 = vmul.f32 %v1028, 1.442695
    %v1030 = vpow.pop %v1029
    %v1031 = vadd.f32 %v1030, 1.0
    %v1032 = vrcp.pop %v1031
    %v1033 = vmul.f32 %v1031, %v1032
    %v1034 = vsub.f32 1.0, %v1033
    %v1035 = vmul.f32 %v1032, %v1034
    %v1036 = vadd.f32 %v1032, %v1035
    %vm1037 = vweird.f32 %v1031
    %vm1038 = vweird.f32 %v1032
    %vm1039 = vmor %vm1037, %vm1038
    %v1040 = vsel %vm1039, %v1032, %v1036
    %v1041 = vand.u32 2147483647, %v1031
    %vm1042 = vcmp.eq.f32.partialorder %v1041, 8.507059e+37
    %v1043 = vand.u32 %v1031, 2147483648
    %v1044 = vor.u32 1.1754944e-38, %v1043
    %v1045 = vsel %vm1042, %v1044, %v1040
    %v1046 = vmul.f32 1.0, %v1045
    %v1047 = vtanh.pop %v1027
    %v1048 = vmul.f32 %v1046, %v995
    %1050 = vrot.lane.b32.xlu0 %v1047, 64
    %v1051 = vpop.permute.xlu0 %1050
    %v1053 = vmul.f32 %v1046, %v1051
    %1055 = vrot.lane.b32.xlu0 %v1053, 32
    %v1056 = vpop.permute.xlu0 %1055
    %v1058 = vadd.f32 %v1048, %v1056
    %v1059 = vtanh.pop %v1058
    %1061 = vrot.lane.b32.xlu0 %v1059, 64
    %v1062 = vpop.permute.xlu0 %1061
    %v1064 = vmul.f32 %v1046, %v1062
    %1066 = vrot.lane.b32.xlu0 %v1064, 32
    %v1067 = vpop.permute.xlu0 %1066
    %v1068 = vsel %vm132, %v1067, 0
    %1070 = vmatpush.msra.mxu0 0.0
    %1071 = vmatpush.msra.mxu0 0.0
    %1072 = vmatpush.msra.mxu0 0.0
    %1073 = vmatpush.msra.mxu0 0.0
    %1074 = vmatpush.msra.mxu0 0.0
    %1075 = vmatpush.msra.mxu0 0.0
    %1076 = vmatpush.msra.mxu0 0.0
    %1077 = vmatpush.msra.mxu0 0.0
    %1078 = vmatpush.msra.mxu0 0.0
    %1079 = vmatpush.msra.mxu0 0.0
    %1080 = vmatpush.msra.mxu0 0.0
    %1081 = vmatpush.msra.mxu0 0.0
    %1082 = vmatpush.msra.mxu0 %v643
    %1083 = vmatpush.msra.mxu0 %v642
    %1084 = vmatpush.msra.mxu0 %v641
    %1085 = vmatpush.msra.mxu0 %v640
    %1086 = vmatmul.f32.gmra.mxu0 %v1068
    %v1087 = vpop.f32.mrf.mxu0
    %v1088 = vadd.f32 0.0, %v1087
    %1089 = vdwg.mxu0
    %v1090 = vadd.f32 %v687, %v1088
    %v1091 = vxor.u32 %v1090, 2147483648
    %v1092 = vmul.f32 %v1091, 1.442695
    %v1093 = vpow.pop %v1092
    %v1094 = vadd.f32 %v1093, 1.0
    %v1095 = vrcp.pop %v1094
    %v1096 = vmul.f32 %v1094, %v1095
    %v1097 = vsub.f32 1.0, %v1096
    %v1098 = vmul.f32 %v1095, %v1097
    %v1099 = vadd.f32 %v1095, %v1098
    %vm1100 = vweird.f32 %v1094
    %vm1101 = vweird.f32 %v1095
    %vm1102 = vmor %vm1100, %vm1101
    %v1103 = vsel %vm1102, %v1095, %v1099
    %v1104 = vand.u32 2147483647, %v1094
    %vm1105 = vcmp.eq.f32.partialorder %v1104, 8.507059e+37
    %v1106 = vand.u32 %v1094, 2147483648
    %v1107 = vor.u32 1.1754944e-38, %v1106
    %v1108 = vsel %vm1105, %v1107, %v1103
    %v1109 = vmul.f32 1.0, %v1108
    %v1110 = vtanh.pop %v1090
    %v1111 = vmul.f32 %v1109, %v1058
    %1113 = vrot.lane.b32.xlu0 %v1110, 64
    %v1114 = vpop.permute.xlu0 %1113
    %v1116 = vmul.f32 %v1109, %v1114
    %1118 = vrot.lane.b32.xlu0 %v1116, 32
    %v1119 = vpop.permute.xlu0 %1118
    %v1121 = vadd.f32 %v1111, %v1119
    %v1122 = vtanh.pop %v1121
    %1124 = vrot.lane.b32.xlu0 %v1122, 64
    %v1125 = vpop.permute.xlu0 %1124
    %v1127 = vmul.f32 %v1109, %v1125
    %1129 = vrot.lane.b32.xlu0 %v1127, 32
    %v1130 = vpop.permute.xlu0 %1129
    %v1131 = vsel %vm132, %v1130, 0
    %1133 = vmatpush.msra.mxu0 0.0
    %1134 = vmatpush.msra.mxu0 0.0
    %1135 = vmatpush.msra.mxu0 0.0
    %1136 = vmatpush.msra.mxu0 0.0
    %1137 = vmatpush.msra.mxu0 0.0
    %1138 = vmatpush.msra.mxu0 0.0
    %1139 = vmatpush.msra.mxu0 0.0
    %1140 = vmatpush.msra.mxu0 0.0
    %1141 = vmatpush.msra.mxu0 0.0
    %1142 = vmatpush.msra.mxu0 0.0
    %1143 = vmatpush.msra.mxu0 0.0
    %1144 = vmatpush.msra.mxu0 0.0
    %1145 = vmatpush.msra.mxu0 %v643
    %1146 = vmatpush.msra.mxu0 %v642
    %1147 = vmatpush.msra.mxu0 %v641
    %1148 = vmatpush.msra.mxu0 %v640
    %1149 = vmatmul.f32.gmra.mxu0 %v1131
    %v1150 = vpop.f32.mrf.mxu0
    %v1151 = vadd.f32 0.0, %v1150
    %1152 = vdwg.mxu0
    %v1153 = vadd.f32 %v690, %v1151
    %v1154 = vxor.u32 %v1153, 2147483648
    %v1155 = vmul.f32 %v1154, 1.442695
    %v1156 = vpow.pop %v1155
    %v1157 = vadd.f32 %v1156, 1.0
    %v1158 = vrcp.pop %v1157
    %v1159 = vmul.f32 %v1157, %v1158
    %v1160 = vsub.f32 1.0, %v1159
    %v1161 = vmul.f32 %v1158, %v1160
    %v1162 = vadd.f32 %v1158, %v1161
    %vm1163 = vweird.f32 %v1157
    %vm1164 = vweird.f32 %v1158
    %vm1165 = vmor %vm1163, %vm1164
    %v1166 = vsel %vm1165, %v1158, %v1162
    %v1167 = vand.u32 2147483647, %v1157
    %vm1168 = vcmp.eq.f32.partialorder %v1167, 8.507059e+37
    %v1169 = vand.u32 %v1157, 2147483648
    %v1170 = vor.u32 1.1754944e-38, %v1169
    %v1171 = vsel %vm1168, %v1170, %v1166
    %v1172 = vmul.f32 1.0, %v1171
    %v1173 = vtanh.pop %v1153
    %v1174 = vmul.f32 %v1172, %v1121
    %1176 = vrot.lane.b32.xlu0 %v1173, 64
    %v1177 = vpop.permute.xlu0 %1176
    %v1179 = vmul.f32 %v1172, %v1177
    %1181 = vrot.lane.b32.xlu0 %v1179, 32
    %v1182 = vpop.permute.xlu0 %1181
    %v1184 = vadd.f32 %v1174, %v1182
    %v1185 = vtanh.pop %v1184
    %1187 = vrot.lane.b32.xlu0 %v1185, 64
    %v1188 = vpop.permute.xlu0 %1187
    %v1190 = vmul.f32 %v1172, %v1188
    %v1191 = vld [vmem:[%s2 + $0x2] sm:$0x1]
    %v1192 = vperm.slane %v1191, 0
    %1194 = vrot.lane.b32.xlu0 %v1192, 96
    %v1195 = vpop.permute.xlu0 %1194
    %v1197 = vmul.f32 %v1190, %v1195
    %1199 = vrot.lane.b32.xlu0 %v1197, 32
    %v1200 = vpop.permute.xlu0 %1199
    %v1202 = vsel %vm132, %v1200, 0.0
    %1203 = vadd.xlane.f32.xlu0 %v1202
    %v1204 = vpop.xlane.xlu0 %1203
    %v1205 = vadd.f32 %v1204, %v1192
    %1207 = vrot.lane.b32.xlu0 %v1205, 96
    %v1208 = vpop.permute.xlu0 %1207
    %vm1210 = vcmask 7168
    %1211 = vst.msk [vmem:[%s3] sm:$0xff] %vm1210, %v1208
    // Predicated region
    $region18: #{tpu_custom_call.1} parent=1 // pred_check
      _
    $region19: #{tpu_custom_call.1} parent=1 // pred_check_branch
      %1213 = sbr.rel (0) target = $region21
    $region20: #{tpu_custom_call.1} parent=1 // pred_region
      _
    $region21: #{tpu_custom_call.1} parent=1 // pred_fallthru
      _
    // Predicated region
    $region22: #{tpu_custom_call.1} parent=1 // pred_check
      _
    $region23: #{tpu_custom_call.1} parent=1 // pred_check_branch
      %1215 = sbr.rel (0) target = $region25
    $region24: #{tpu_custom_call.1} parent=1 // pred_region
      _
    $region25: #{tpu_custom_call.1} parent=1 // pred_fallthru
      _
    %1216 = vsyncpa [#allocation3], 1

</llo_original>
